<compile_context>
chip_gen: v7x
topology: tpu7x:2x2x1
jax: 0.10.0
libtpu: 0.0.40
codegen_flags: <defaults>
</compile_context>

<pallas_src>
import functools

import jax
import jax.numpy as jnp
from jax import lax
from jax.experimental import pallas as pl
from jax.experimental.pallas import tpu as pltpu


def _round_up(x, m):
    return (x + m - 1) // m * m


def _sswe_fused_gather_kernel(ids_ref, embT_ref, w1_ref, b1_ref, wh_ref, bh_ref,
                              out_ref, *, context_size, emb_size):
    """Gather (one-hot MXU matmuls) + MLP, everything stays in VMEM.

    ids_ref : (C, TB)   int32  -- lane axis = batch
    embT_ref: (E, Vp)   cdt    -- VMEM-resident transposed embedding table
    w1_ref  : (H, C*E)  cdt    -- VMEM-resident
    b1_ref  : (H, 1)    f32
    wh_ref  : (8, H)    f32    -- rows 0/1 = context/score heads, rest zero
    bh_ref  : (8, 1)    f32
    out_ref : (8, TB)   f32
    """
    C, E = context_size, emb_size
    TB = out_ref.shape[1]
    Vp = embT_ref.shape[1]
    cdt = w1_ref.dtype

    ids = ids_ref[...]                                      # (C, TB) int32
    # Hoisted out of the loop: JAX does not CSE broadcast/iota.
    iota_v = lax.broadcasted_iota(jnp.int32, (Vp, TB), 0)   # (Vp, TB)

    parts = []
    for c in range(C):                                      # static unroll, C small
        onehot = (iota_v == ids[c:c + 1, :]).astype(cdt)    # (Vp, TB)
        # exact row selection of the embedding table on the MXU
        parts.append(jnp.dot(embT_ref[...], onehot,
                             preferred_element_type=jnp.float32))   # (E, TB)
    s_T = jnp.concatenate(parts, axis=0).astype(cdt)        # (C*E, TB), lossless cast

    # emb_to_hidden (transposed): (H, C*E) @ (C*E, TB) -> (H, TB), f32 acc
    h = jnp.dot(w1_ref[...], s_T, preferred_element_type=jnp.float32)
    h = jnp.clip(h + b1_ref[...], -1.0, 1.0)                # hardtanh, f32

    # fused heads: (8, H) @ (H, TB) + (8, 1) -> (8, TB); rows 0/1 = fc/fs
    out_ref[...] = jnp.dot(wh_ref[...], h,
                           preferred_element_type=jnp.float32) + bh_ref[...]


def _sswe_matmul_kernel(s_ref, w1_ref, b1_ref, wh_ref, bh_ref, out_ref):
    """Fallback (wrapper-side gather): s is batch-major (TB, C*E).

    Contract with trans_b so the MXU consumes the transposed operand natively;
    no transposed HBM write is ever produced in the wrapper.
    """
    h = lax.dot_general(w1_ref[...], s_ref[...],
                        (((1,), (1,)), ((), ())),
                        preferred_element_type=jnp.float32)          # (H, TB)
    h = jnp.clip(h + b1_ref[...], -1.0, 1.0)
    out_ref[...] = jnp.dot(wh_ref[...], h,
                           preferred_element_type=jnp.float32) + bh_ref[...]


def sswe_forward(input_ids, params, *, block_b=2048,
                 compute_dtype=jnp.bfloat16, fuse_gather=None):
    """input_ids: (B, context_size) int.  Returns (fc, fs), each shape (B,)
    (scalars when B == 1, matching torch .squeeze()).

    compute_dtype applies only to the dominant streams (emb / s / W1);
    accumulation, bias, hardtanh and the head matmul stay f32.
    """
    emb = params["embeddings"]            # (V, E), row 0 == 0 (padding_idx)
    w1 = params["w1"]                     # (H, C*E)  -- PyTorch Linear layout
    b1 = params["b1"]                     # (H,)
    wc, bc = params["wc"], params["bc"]   # (1, H), (1,)
    ws, bs = params["ws"], params["bs"]   # (1, H), (1,)

    B, C = input_ids.shape
    V, E = emb.shape
    CE = C * E
    H = w1.shape[0]

    # Batch tile: lane axis of every kernel operand / output is the batch.
    # Always a multiple of 128 (lane constraint), regardless of caller input.
    TB = _round_up(min(block_b, max(B, 1)), 128)
    Bp = _round_up(B, TB)
    grid = (Bp // TB,)

    # Small VMEM-resident operands (constant index maps, fetched once).
    b1_2d = b1.reshape(H, 1).astype(jnp.float32)
    # Heads fused + padded to 8 sublanes -> unmasked full-vreg stores.
    w_heads = jnp.zeros((8, H), jnp.float32).at[0].set(wc[0]).at[1].set(ws[0])
    b_heads = (jnp.zeros((8, 1), jnp.float32)
               .at[0, 0].set(bc[0]).at[1, 0].set(bs[0]))
    w1c = w1.astype(compute_dtype)

    if fuse_gather is None:
        # One-hot MXU gather only pays off while the padded table stays small.
        fuse_gather = V <= 4096

    common_specs = [
        pl.BlockSpec((H, CE), lambda i: (0, 0)),
        pl.BlockSpec((H, 1), lambda i: (0, 0)),
        pl.BlockSpec((8, H), lambda i: (0, 0)),
        pl.BlockSpec((8, 1), lambda i: (0, 0)),
    ]
    out_spec = pl.BlockSpec((8, TB), lambda i: (0, i))
    out_shape = jax.ShapeDtypeStruct((8, Bp), jnp.float32)
    cparams = pltpu.CompilerParams(dimension_semantics=("parallel",))

    if fuse_gather:
        Vp = _round_up(V, 128)
        embT = jnp.zeros((E, Vp), compute_dtype).at[:, :V].set(
            emb.T.astype(compute_dtype))
        # Padded batch rows use id 0 (padding_idx -> zero row); sliced off below.
        ids_T = jnp.pad(input_ids.astype(jnp.int32),
                        ((0, Bp - B), (0, 0))).T                  # (C, Bp), tiny
        kernel = functools.partial(_sswe_fused_gather_kernel,
                                   context_size=C, emb_size=E)
        out = pl.pallas_call(
            kernel,
            out_shape=out_shape,
            grid_spec=pltpu.PrefetchScalarGridSpec(
                num_scalar_prefetch=0,
                grid=grid,
                in_specs=[pl.BlockSpec((C, TB), lambda i: (0, i)),   # ids tile
                          pl.BlockSpec((E, Vp), lambda i: (0, 0))]   # emb table
                         + common_specs,
                out_specs=out_spec),
            compiler_params=cparams,
        )(ids_T, embT, w1c, b1_2d, w_heads, b_heads)
    else:
        # TODO(synk): for very large vocabularies, replace this wrapper gather
        # with an in-kernel DMA / jnp.take gather so s never touches HBM.
        ids = jnp.pad(input_ids.astype(jnp.int32), ((0, Bp - B), (0, 0)))
        s = jnp.take(emb, ids, axis=0).reshape(Bp, CE).astype(compute_dtype)
        out = pl.pallas_call(
            _sswe_matmul_kernel,
            out_shape=out_shape,
            grid_spec=pltpu.PrefetchScalarGridSpec(
                num_scalar_prefetch=0,
                grid=grid,
                in_specs=[pl.BlockSpec((TB, CE), lambda i: (i, 0))]  # batch-major s
                         + common_specs,
                out_specs=out_spec),
            compiler_params=cparams,
        )(s, w1c, b1_2d, w_heads, b_heads)

    fc = out[0, :B]
    fs = out[1, :B]
    if B == 1:
        # torch .squeeze() also drops the batch dim when B == 1
        return fc[0], fs[0]
    return fc, fs


def init_params(key, vocab_len, context_size, emb_size, n_hidden_units):
    """Deterministic synthetic init mirroring SSWEModel.init_weights shapes/stats."""
    k_emb, k_w1, k_wc, k_ws = jax.random.split(key, 4)
    in_features = emb_size * context_size

    embeddings = jax.random.normal(k_emb, (vocab_len, emb_size), jnp.float32)
    embeddings = embeddings.at[0].set(0.0)  # padding_idx=0

    # PyTorch Linear weight layout: (out_features, in_features)
    w1 = jax.random.normal(k_w1, (n_hidden_units, in_features),
                           jnp.float32) * (1.0 / in_features)
    b1 = jnp.zeros((n_hidden_units,), jnp.float32)

    wc = jax.random.normal(k_wc, (1, n_hidden_units),
                           jnp.float32) * (1.0 / n_hidden_units)
    bc = jnp.zeros((1,), jnp.float32)

    ws = jax.random.normal(k_ws, (1, n_hidden_units),
                           jnp.float32) * (1.0 / n_hidden_units)
    bs = jnp.zeros((1,), jnp.float32)

    return {"embeddings": embeddings, "w1": w1, "b1": b1,
            "wc": wc, "bc": bc, "ws": ws, "bs": bs}


if __name__ == "__main__":
    VOCAB = 50
    CONTEXT = 8
    EMB = 16          # in_features = 8 * 16 = 128 (lane-aligned)
    HIDDEN = 32
    BATCH = 256

    key = jax.random.PRNGKey(0)
    k_params, k_input = jax.random.split(key)

    params = init_params(k_params, VOCAB, CONTEXT, EMB, HIDDEN)
    input_ids = jax.random.randint(k_input, (BATCH, CONTEXT), 0, VOCAB,
                                   dtype=jnp.int32)

    # Pure-JAX reference
    s = jnp.take(params["embeddings"], input_ids, axis=0).reshape(BATCH, -1)
    h = jnp.clip(s @ params["w1"].T + params["b1"], -1.0, 1.0)
    fc_ref = (h @ params["wc"].T + params["bc"]).reshape(BATCH)
    fs_ref = (h @ params["ws"].T + params["bs"]).reshape(BATCH)

    # 1) fused in-kernel gather, f32 compute -> tight tolerance
    fwd_f32 = jax.jit(functools.partial(sswe_forward, compute_dtype=jnp.float32))
    fc, fs = fwd_f32(input_ids, params)
    jax.block_until_ready((fc, fs))
    assert fc.shape == (BATCH,) and fs.shape == (BATCH,), "shape mismatch"
    assert jnp.allclose(fc, fc_ref, atol=2e-5), "fc mismatch (fused f32)"
    assert jnp.allclose(fs, fs_ref, atol=2e-5), "fs mismatch (fused f32)"

    # 2) fused gather, bf16 inputs (default) -> loose tolerance
    fwd_bf16 = jax.jit(sswe_forward)
    fc, fs = fwd_bf16(input_ids, params)
    jax.block_until_ready((fc, fs))
    assert jnp.allclose(fc, fc_ref, atol=2e-2), "fc mismatch (fused bf16)"
    assert jnp.allclose(fs, fs_ref, atol=2e-2), "fs mismatch (fused bf16)"

    # 3) wrapper-gather fallback path (large-vocab route), f32 -> tight
    fwd_fb = jax.jit(functools.partial(sswe_forward, fuse_gather=False,
                                       compute_dtype=jnp.float32))
    fc, fs = fwd_fb(input_ids, params)
    jax.block_until_ready((fc, fs))
    assert jnp.allclose(fc, fc_ref, atol=2e-5), "fc mismatch (fallback)"
    assert jnp.allclose(fs, fs_ref, atol=2e-5), "fs mismatch (fallback)"

    print("KERNEL_OK")
</pallas_src>

<mosaic_0001>
module attributes {stable_mosaic.version = 11 : i64} {
  func.func @_sswe_fused_gather_kernel(%arg0: i32, %arg1: memref<8x256xi32, #tpu.memory_space<vmem>>, %arg2: memref<16x128xf32, #tpu.memory_space<vmem>>, %arg3: memref<32x128xf32, #tpu.memory_space<vmem>>, %arg4: memref<32x1xf32, #tpu.memory_space<vmem>>, %arg5: memref<8x32xf32, #tpu.memory_space<vmem>>, %arg6: memref<8x1xf32, #tpu.memory_space<vmem>>, %arg7: memref<8x256xf32, #tpu.memory_space<vmem>>) attributes {dimension_semantics = [#tpu.dimension_semantics<parallel>], iteration_bounds = array<i64: 1>, scalar_prefetch = 0 : i64, scratch_operands = 0 : i64, tpu.core_type = #tpu.core_type<tc>, window_params = [{transform_indices = @transform_0, window_bounds = array<i64: 8, 256>}, {pipeline_mode = #tpu.pipeline_mode<synchronous>, transform_indices = @transform_1, window_bounds = array<i64: 16, 128>}, {pipeline_mode = #tpu.pipeline_mode<synchronous>, transform_indices = @transform_2, window_bounds = array<i64: 32, 128>}, {pipeline_mode = #tpu.pipeline_mode<synchronous>, transform_indices = @transform_3, window_bounds = array<i64: 32, 1>}, {pipeline_mode = #tpu.pipeline_mode<synchronous>, transform_indices = @transform_4, window_bounds = array<i64: 8, 32>}, {pipeline_mode = #tpu.pipeline_mode<synchronous>, transform_indices = @transform_5, window_bounds = array<i64: 8, 1>}, {transform_indices = @transform_6, window_bounds = array<i64: 8, 256>}]} {
    %c0 = arith.constant 0 : index
    %c0_0 = arith.constant 0 : index
    %0 = vector.load %arg1[%c0, %c0_0] : memref<8x256xi32, #tpu.memory_space<vmem>>, vector<8x256xi32>
    %1 = tpu.iota {dimensions = array<i32: 0>} : vector<128x256xi32>
    %2 = vector.extract_strided_slice %0 {offsets = [0, 0], sizes = [1, 256], strides = [1, 1]} : vector<8x256xi32> to vector<1x256xi32>
    %3 = vector.broadcast %2 : vector<1x256xi32> to vector<128x256xi32>
    %4 = arith.cmpi eq, %1, %3 : vector<128x256xi32>
    %5 = arith.extui %4 : vector<128x256xi1> to vector<128x256xi32>
    %6 = arith.sitofp %5 : vector<128x256xi32> to vector<128x256xf32>
    %c0_1 = arith.constant 0 : index
    %c0_2 = arith.constant 0 : index
    %7 = vector.load %arg2[%c0_1, %c0_2] : memref<16x128xf32, #tpu.memory_space<vmem>>, vector<16x128xf32>
    %cst = arith.constant dense<0.000000e+00> : vector<16x256xf32>
    %8 = tpu.matmul %7, %6, %cst {dimension_numbers = #tpu.dot_dimension_numbers<[1], [0], [0], [1], [0, 0, 1, 1], [], []>} : vector<16x128xf32>, vector<128x256xf32>, vector<16x256xf32> -> vector<16x256xf32>
    %9 = vector.extract_strided_slice %0 {offsets = [1, 0], sizes = [1, 256], strides = [1, 1]} : vector<8x256xi32> to vector<1x256xi32>
    %10 = vector.broadcast %9 : vector<1x256xi32> to vector<128x256xi32>
    %11 = arith.cmpi eq, %1, %10 : vector<128x256xi32>
    %12 = arith.extui %11 : vector<128x256xi1> to vector<128x256xi32>
    %13 = arith.sitofp %12 : vector<128x256xi32> to vector<128x256xf32>
    %c0_3 = arith.constant 0 : index
    %c0_4 = arith.constant 0 : index
    %14 = vector.load %arg2[%c0_3, %c0_4] : memref<16x128xf32, #tpu.memory_space<vmem>>, vector<16x128xf32>
    %cst_5 = arith.constant dense<0.000000e+00> : vector<16x256xf32>
    %15 = tpu.matmul %14, %13, %cst_5 {dimension_numbers = #tpu.dot_dimension_numbers<[1], [0], [0], [1], [0, 0, 1, 1], [], []>} : vector<16x128xf32>, vector<128x256xf32>, vector<16x256xf32> -> vector<16x256xf32>
    %16 = vector.extract_strided_slice %0 {offsets = [2, 0], sizes = [1, 256], strides = [1, 1]} : vector<8x256xi32> to vector<1x256xi32>
    %17 = vector.broadcast %16 : vector<1x256xi32> to vector<128x256xi32>
    %18 = arith.cmpi eq, %1, %17 : vector<128x256xi32>
    %19 = arith.extui %18 : vector<128x256xi1> to vector<128x256xi32>
    %20 = arith.sitofp %19 : vector<128x256xi32> to vector<128x256xf32>
    %c0_6 = arith.constant 0 : index
    %c0_7 = arith.constant 0 : index
    %21 = vector.load %arg2[%c0_6, %c0_7] : memref<16x128xf32, #tpu.memory_space<vmem>>, vector<16x128xf32>
    %cst_8 = arith.constant dense<0.000000e+00> : vector<16x256xf32>
    %22 = tpu.matmul %21, %20, %cst_8 {dimension_numbers = #tpu.dot_dimension_numbers<[1], [0], [0], [1], [0, 0, 1, 1], [], []>} : vector<16x128xf32>, vector<128x256xf32>, vector<16x256xf32> -> vector<16x256xf32>
    %23 = vector.extract_strided_slice %0 {offsets = [3, 0], sizes = [1, 256], strides = [1, 1]} : vector<8x256xi32> to vector<1x256xi32>
    %24 = vector.broadcast %23 : vector<1x256xi32> to vector<128x256xi32>
    %25 = arith.cmpi eq, %1, %24 : vector<128x256xi32>
    %26 = arith.extui %25 : vector<128x256xi1> to vector<128x256xi32>
    %27 = arith.sitofp %26 : vector<128x256xi32> to vector<128x256xf32>
    %c0_9 = arith.constant 0 : index
    %c0_10 = arith.constant 0 : index
    %28 = vector.load %arg2[%c0_9, %c0_10] : memref<16x128xf32, #tpu.memory_space<vmem>>, vector<16x128xf32>
    %cst_11 = arith.constant dense<0.000000e+00> : vector<16x256xf32>
    %29 = tpu.matmul %28, %27, %cst_11 {dimension_numbers = #tpu.dot_dimension_numbers<[1], [0], [0], [1], [0, 0, 1, 1], [], []>} : vector<16x128xf32>, vector<128x256xf32>, vector<16x256xf32> -> vector<16x256xf32>
    %30 = vector.extract_strided_slice %0 {offsets = [4, 0], sizes = [1, 256], strides = [1, 1]} : vector<8x256xi32> to vector<1x256xi32>
    %31 = vector.broadcast %30 : vector<1x256xi32> to vector<128x256xi32>
    %32 = arith.cmpi eq, %1, %31 : vector<128x256xi32>
    %33 = arith.extui %32 : vector<128x256xi1> to vector<128x256xi32>
    %34 = arith.sitofp %33 : vector<128x256xi32> to vector<128x256xf32>
    %c0_12 = arith.constant 0 : index
    %c0_13 = arith.constant 0 : index
    %35 = vector.load %arg2[%c0_12, %c0_13] : memref<16x128xf32, #tpu.memory_space<vmem>>, vector<16x128xf32>
    %cst_14 = arith.constant dense<0.000000e+00> : vector<16x256xf32>
    %36 = tpu.matmul %35, %34, %cst_14 {dimension_numbers = #tpu.dot_dimension_numbers<[1], [0], [0], [1], [0, 0, 1, 1], [], []>} : vector<16x128xf32>, vector<128x256xf32>, vector<16x256xf32> -> vector<16x256xf32>
    %37 = vector.extract_strided_slice %0 {offsets = [5, 0], sizes = [1, 256], strides = [1, 1]} : vector<8x256xi32> to vector<1x256xi32>
    %38 = vector.broadcast %37 : vector<1x256xi32> to vector<128x256xi32>
    %39 = arith.cmpi eq, %1, %38 : vector<128x256xi32>
    %40 = arith.extui %39 : vector<128x256xi1> to vector<128x256xi32>
    %41 = arith.sitofp %40 : vector<128x256xi32> to vector<128x256xf32>
    %c0_15 = arith.constant 0 : index
    %c0_16 = arith.constant 0 : index
    %42 = vector.load %arg2[%c0_15, %c0_16] : memref<16x128xf32, #tpu.memory_space<vmem>>, vector<16x128xf32>
    %cst_17 = arith.constant dense<0.000000e+00> : vector<16x256xf32>
    %43 = tpu.matmul %42, %41, %cst_17 {dimension_numbers = #tpu.dot_dimension_numbers<[1], [0], [0], [1], [0, 0, 1, 1], [], []>} : vector<16x128xf32>, vector<128x256xf32>, vector<16x256xf32> -> vector<16x256xf32>
    %44 = vector.extract_strided_slice %0 {offsets = [6, 0], sizes = [1, 256], strides = [1, 1]} : vector<8x256xi32> to vector<1x256xi32>
    %45 = vector.broadcast %44 : vector<1x256xi32> to vector<128x256xi32>
    %46 = arith.cmpi eq, %1, %45 : vector<128x256xi32>
    %47 = arith.extui %46 : vector<128x256xi1> to vector<128x256xi32>
    %48 = arith.sitofp %47 : vector<128x256xi32> to vector<128x256xf32>
    %c0_18 = arith.constant 0 : index
    %c0_19 = arith.constant 0 : index
    %49 = vector.load %arg2[%c0_18, %c0_19] : memref<16x128xf32, #tpu.memory_space<vmem>>, vector<16x128xf32>
    %cst_20 = arith.constant dense<0.000000e+00> : vector<16x256xf32>
    %50 = tpu.matmul %49, %48, %cst_20 {dimension_numbers = #tpu.dot_dimension_numbers<[1], [0], [0], [1], [0, 0, 1, 1], [], []>} : vector<16x128xf32>, vector<128x256xf32>, vector<16x256xf32> -> vector<16x256xf32>
    %51 = vector.extract_strided_slice %0 {offsets = [7, 0], sizes = [1, 256], strides = [1, 1]} : vector<8x256xi32> to vector<1x256xi32>
    %52 = vector.broadcast %51 : vector<1x256xi32> to vector<128x256xi32>
    %53 = arith.cmpi eq, %1, %52 : vector<128x256xi32>
    %54 = arith.extui %53 : vector<128x256xi1> to vector<128x256xi32>
    %55 = arith.sitofp %54 : vector<128x256xi32> to vector<128x256xf32>
    %c0_21 = arith.constant 0 : index
    %c0_22 = arith.constant 0 : index
    %56 = vector.load %arg2[%c0_21, %c0_22] : memref<16x128xf32, #tpu.memory_space<vmem>>, vector<16x128xf32>
    %cst_23 = arith.constant dense<0.000000e+00> : vector<16x256xf32>
    %57 = tpu.matmul %56, %55, %cst_23 {dimension_numbers = #tpu.dot_dimension_numbers<[1], [0], [0], [1], [0, 0, 1, 1], [], []>} : vector<16x128xf32>, vector<128x256xf32>, vector<16x256xf32> -> vector<16x256xf32>
    %58 = tpu.concatenate %8, %15, %22, %29, %36, %43, %50, %57 in 0 : vector<16x256xf32>, vector<16x256xf32>, vector<16x256xf32>, vector<16x256xf32>, vector<16x256xf32>, vector<16x256xf32>, vector<16x256xf32>, vector<16x256xf32> -> vector<128x256xf32>
    %c0_24 = arith.constant 0 : index
    %c0_25 = arith.constant 0 : index
    %59 = vector.load %arg3[%c0_24, %c0_25] : memref<32x128xf32, #tpu.memory_space<vmem>>, vector<32x128xf32>
    %cst_26 = arith.constant dense<0.000000e+00> : vector<32x256xf32>
    %60 = tpu.matmul %59, %58, %cst_26 {dimension_numbers = #tpu.dot_dimension_numbers<[1], [0], [0], [1], [0, 0, 1, 1], [], []>} : vector<32x128xf32>, vector<128x256xf32>, vector<32x256xf32> -> vector<32x256xf32>
    %c0_27 = arith.constant 0 : index
    %c0_28 = arith.constant 0 : index
    %61 = vector.load %arg4[%c0_27, %c0_28] : memref<32x1xf32, #tpu.memory_space<vmem>>, vector<32x1xf32>
    %62 = vector.broadcast %61 : vector<32x1xf32> to vector<32x256xf32>
    %63 = arith.addf %60, %62 : vector<32x256xf32>
    %cst_29 = arith.constant -1.000000e+00 : f32
    %cst_30 = arith.constant 1.000000e+00 : f32
    %64 = vector.broadcast %cst_29 : f32 to vector<32x256xf32>
    %65 = arith.maximumf %64, %63 : vector<32x256xf32>
    %66 = vector.broadcast %cst_30 : f32 to vector<32x256xf32>
    %67 = arith.minimumf %66, %65 : vector<32x256xf32>
    %c0_31 = arith.constant 0 : index
    %c0_32 = arith.constant 0 : index
    %68 = vector.load %arg5[%c0_31, %c0_32] : memref<8x32xf32, #tpu.memory_space<vmem>>, vector<8x32xf32>
    %cst_33 = arith.constant dense<0.000000e+00> : vector<8x256xf32>
    %69 = tpu.matmul %68, %67, %cst_33 {dimension_numbers = #tpu.dot_dimension_numbers<[1], [0], [0], [1], [0, 0, 1, 1], [], []>} : vector<8x32xf32>, vector<32x256xf32>, vector<8x256xf32> -> vector<8x256xf32>
    %c0_34 = arith.constant 0 : index
    %c0_35 = arith.constant 0 : index
    %70 = vector.load %arg6[%c0_34, %c0_35] : memref<8x1xf32, #tpu.memory_space<vmem>>, vector<8x1xf32>
    %71 = vector.broadcast %70 : vector<8x1xf32> to vector<8x256xf32>
    %72 = arith.addf %69, %71 : vector<8x256xf32>
    %c0_36 = arith.constant 0 : index
    %c0_37 = arith.constant 0 : index
    %73 = vector.load %arg7[%c0_36, %c0_37] : memref<8x256xf32, #tpu.memory_space<vmem>>, vector<8x256xf32>
    tpu.vector_store %arg7[%c0_36, %c0_37], %72 {strides = array<i32>} : memref<8x256xf32, #tpu.memory_space<vmem>>, vector<8x256xf32>,
    return
  }
  func.func @transform_0(%arg0: i32) -> (i32, i32) {
    %c0_i32 = arith.constant 0 : i32
    %c0_i32_0 = arith.constant 0 : i32
    return %c0_i32, %arg0 : i32, i32
  }
  func.func @transform_1(%arg0: i32) -> (i32, i32) {
    %c0_i32 = arith.constant 0 : i32
    %c0_i32_0 = arith.constant 0 : i32
    %c0_i32_1 = arith.constant 0 : i32
    return %c0_i32, %c0_i32_0 : i32, i32
  }
  func.func @transform_2(%arg0: i32) -> (i32, i32) {
    %c0_i32 = arith.constant 0 : i32
    %c0_i32_0 = arith.constant 0 : i32
    %c0_i32_1 = arith.constant 0 : i32
    return %c0_i32, %c0_i32_0 : i32, i32
  }
  func.func @transform_3(%arg0: i32) -> (i32, i32) {
    %c0_i32 = arith.constant 0 : i32
    %c0_i32_0 = arith.constant 0 : i32
    %c0_i32_1 = arith.constant 0 : i32
    return %c0_i32, %c0_i32_0 : i32, i32
  }
  func.func @transform_4(%arg0: i32) -> (i32, i32) {
    %c0_i32 = arith.constant 0 : i32
    %c0_i32_0 = arith.constant 0 : i32
    %c0_i32_1 = arith.constant 0 : i32
    return %c0_i32, %c0_i32_0 : i32, i32
  }
  func.func @transform_5(%arg0: i32) -> (i32, i32) {
    %c0_i32 = arith.constant 0 : i32
    %c0_i32_0 = arith.constant 0 : i32
    %c0_i32_1 = arith.constant 0 : i32
    return %c0_i32, %c0_i32_0 : i32, i32
  }
  func.func @transform_6(%arg0: i32) -> (i32, i32) {
    %c0_i32 = arith.constant 0 : i32
    %c0_i32_0 = arith.constant 0 : i32
    return %c0_i32, %arg0 : i32, i32
  }
}

</mosaic_0001>

<llo_original>
// kernel: sswe_forward.1
$region0: #{sswe_forward.1}
  #allocation0 [shape = 'u32[]', space=smem, size = 0x4, offset = 0x4, fixed_abs, tag = 'smem constant byte address 0x4 - core index']
  #allocation1 [shape = 'u32[144,128]{1,0:T(1,128)}', space=vmem, size = 0x12000, scoped, tag = 'internal scratch']
  %s0 = inlined_call_operand.vmem [shape: s32[8,256], index: 0, kind: input, shape index: {}]
  %s1 = inlined_call_operand.vmem [shape: f32[16,128], index: 1, kind: input, shape index: {}]
  %s2 = inlined_call_operand.vmem [shape: f32[32,128], index: 2, kind: input, shape index: {}]
  %s3 = inlined_call_operand.vmem [shape: f32[32,1], index: 3, kind: input, shape index: {}]
  %s4 = inlined_call_operand.vmem [shape: f32[8,32], index: 4, kind: input, shape index: {}]
  %s5 = inlined_call_operand.vmem [shape: f32[8,1], index: 5, kind: input, shape index: {}]
  %s6 = inlined_call_operand.vmem [shape: f32[8,256], index: 6, kind: output, shape index: {}]
  %s7 = sld [smem:[#allocation0]]
  $region34: #{sswe_forward.1} parent=0
    _
  %s9 = ssub.s32 1, %s7
  %s10 = scalar_select 0, %s9, %s7
  // Predicated region
  $region2: #{sswe_forward.1} parent=0 // pred_check
    _
  $region3: #{sswe_forward.1} parent=0 // pred_check_branch
    %12 = sbr.rel (0) target = $region5
  $region4: #{sswe_forward.1} parent=0 // pred_region
    _
  $region5: #{sswe_forward.1} parent=0 // pred_fallthru
    _
  // Predicated region
  $region6: #{sswe_forward.1} parent=0 // pred_check
    _
  $region7: #{sswe_forward.1} parent=0 // pred_check_branch
    %14 = sbr.rel (0) target = $region9
  $region8: #{sswe_forward.1} parent=0 // pred_region
    _
  $region9: #{sswe_forward.1} parent=0 // pred_fallthru
    _
  // Predicated region
  $region10: #{sswe_forward.1} parent=0 // pred_check
    _
  $region11: #{sswe_forward.1} parent=0 // pred_check_branch
    %16 = sbr.rel (0) target = $region13
  $region12: #{sswe_forward.1} parent=0 // pred_region
    _
  $region13: #{sswe_forward.1} parent=0 // pred_fallthru
    _
  // Predicated region
  $region14: #{sswe_forward.1} parent=0 // pred_check
    _
  $region15: #{sswe_forward.1} parent=0 // pred_check_branch
    %18 = sbr.rel (0) target = $region17
  $region16: #{sswe_forward.1} parent=0 // pred_region
    _
  $region17: #{sswe_forward.1} parent=0 // pred_fallthru
    _
  // Predicated region
  $region18: #{sswe_forward.1} parent=0 // pred_check
    _
  $region19: #{sswe_forward.1} parent=0 // pred_check_branch
    %20 = sbr.rel (0) target = $region21
  $region20: #{sswe_forward.1} parent=0 // pred_region
    _
  $region21: #{sswe_forward.1} parent=0 // pred_fallthru
    _
  // Predicated region
  $region22: #{sswe_forward.1} parent=0 // pred_check
    _
  $region23: #{sswe_forward.1} parent=0 // pred_check_branch
    %22 = sbr.rel (0) target = $region25
  $region24: #{sswe_forward.1} parent=0 // pred_region
    _
  $region25: #{sswe_forward.1} parent=0 // pred_fallthru
    _
  %v23 = vld [vmem:[%s0] sm:$0xff]
  %v24 = vld [vmem:[%s0 + $0x8] sm:$0xff]
  %v25 = vlaneseq
  %v26 = vshrl.u32 %v25, 7
  %v27 = vadd.s32 %v26, 8
  %v28 = vadd.s32 %v26, 16
  %v29 = vadd.s32 %v26, 24
  %v30 = vadd.s32 %v26, 32
  %v31 = vadd.s32 %v26, 40
  %v32 = vadd.s32 %v26, 48
  %v33 = vadd.s32 %v26, 56
  %v34 = vadd.s32 %v26, 64
  %v35 = vadd.s32 %v26, 72
  %v36 = vadd.s32 %v26, 80
  %v37 = vadd.s32 %v26, 88
  %v38 = vadd.s32 %v26, 96
  %v39 = vadd.s32 %v26, 104
  %v40 = vadd.s32 %v26, 112
  %v41 = vadd.s32 %v26, 120
  %v42 = vlaneseq
  %v43 = vshrl.u32 %v42, 7
  %v44 = vsub.s32 0, %v43
  %v45 = vrot.slane %v23, %v44
  %v46 = vlaneseq
  %v47 = vshrl.u32 %v46, 7
  %v48 = vsub.s32 0, %v47
  %v49 = vrot.slane %v24, %v48
  %vm50 = vcmp.eq.s32.totalorder %v26, %v45
  %vm51 = vcmp.eq.s32.totalorder %v26, %v49
  %vm52 = vcmp.eq.s32.totalorder %v27, %v45
  %vm53 = vcmp.eq.s32.totalorder %v27, %v49
  %vm54 = vcmp.eq.s32.totalorder %v28, %v45
  %vm55 = vcmp.eq.s32.totalorder %v28, %v49
  %vm56 = vcmp.eq.s32.totalorder %v29, %v45
  %vm57 = vcmp.eq.s32.totalorder %v29, %v49
  %vm58 = vcmp.eq.s32.totalorder %v30, %v45
  %vm59 = vcmp.eq.s32.totalorder %v30, %v49
  %vm60 = vcmp.eq.s32.totalorder %v31, %v45
  %vm61 = vcmp.eq.s32.totalorder %v31, %v49
  %vm62 = vcmp.eq.s32.totalorder %v32, %v45
  %vm63 = vcmp.eq.s32.totalorder %v32, %v49
  %vm64 = vcmp.eq.s32.totalorder %v33, %v45
  %vm65 = vcmp.eq.s32.totalorder %v33, %v49
  %vm66 = vcmp.eq.s32.totalorder %v34, %v45
  %vm67 = vcmp.eq.s32.totalorder %v34, %v49
  %vm68 = vcmp.eq.s32.totalorder %v35, %v45
  %vm69 = vcmp.eq.s32.totalorder %v35, %v49
  %vm70 = vcmp.eq.s32.totalorder %v36, %v45
  %vm71 = vcmp.eq.s32.totalorder %v36, %v49
  %vm72 = vcmp.eq.s32.totalorder %v37, %v45
  %vm73 = vcmp.eq.s32.totalorder %v37, %v49
  %vm74 = vcmp.eq.s32.totalorder %v38, %v45
  %vm75 = vcmp.eq.s32.totalorder %v38, %v49
  %vm76 = vcmp.eq.s32.totalorder %v39, %v45
  %vm77 = vcmp.eq.s32.totalorder %v39, %v49
  %vm78 = vcmp.eq.s32.totalorder %v40, %v45
  %vm79 = vcmp.eq.s32.totalorder %v40, %v49
  %vm80 = vcmp.eq.s32.totalorder %v41, %v45
  %vm81 = vcmp.eq.s32.totalorder %v41, %v49
  %v82 = vsel %vm50, 1, 0
  %v83 = vsel %vm51, 1, 0
  %v84 = vsel %vm52, 1, 0
  %v85 = vsel %vm53, 1, 0
  %v86 = vsel %vm54, 1, 0
  %v87 = vsel %vm55, 1, 0
  %v88 = vsel %vm56, 1, 0
  %v89 = vsel %vm57, 1, 0
  %v90 = vsel %vm58, 1, 0
  %v91 = vsel %vm59, 1, 0
  %v92 = vsel %vm60, 1, 0
  %v93 = vsel %vm61, 1, 0
  %v94 = vsel %vm62, 1, 0
  %v95 = vsel %vm63, 1, 0
  %v96 = vsel %vm64, 1, 0
  %v97 = vsel %vm65, 1, 0
  %v98 = vsel %vm66, 1, 0
  %v99 = vsel %vm67, 1, 0
  %v100 = vsel %vm68, 1, 0
  %v101 = vsel %vm69, 1, 0
  %v102 = vsel %vm70, 1, 0
  %v103 = vsel %vm71, 1, 0
  %v104 = vsel %vm72, 1, 0
  %v105 = vsel %vm73, 1, 0
  %v106 = vsel %vm74, 1, 0
  %v107 = vsel %vm75, 1, 0
  %v108 = vsel %vm76, 1, 0
  %v109 = vsel %vm77, 1, 0
  %v110 = vsel %vm78, 1, 0
  %v111 = vsel %vm79, 1, 0
  %v112 = vsel %vm80, 1, 0
  %v113 = vsel %vm81, 1, 0
  %v114 = vcvt.s32.f32 %v82
  %v115 = vcvt.s32.f32 %v83
  %v116 = vcvt.s32.f32 %v84
  %v117 = vcvt.s32.f32 %v85
  %v118 = vcvt.s32.f32 %v86
  %v119 = vcvt.s32.f32 %v87
  %v120 = vcvt.s32.f32 %v88
  %v121 = vcvt.s32.f32 %v89
  %v122 = vcvt.s32.f32 %v90
  %v123 = vcvt.s32.f32 %v91
  %v124 = vcvt.s32.f32 %v92
  %v125 = vcvt.s32.f32 %v93
  %v126 = vcvt.s32.f32 %v94
  %v127 = vcvt.s32.f32 %v95
  %v128 = vcvt.s32.f32 %v96
  %v129 = vcvt.s32.f32 %v97
  %v130 = vcvt.s32.f32 %v98
  %v131 = vcvt.s32.f32 %v99
  %v132 = vcvt.s32.f32 %v100
  %v133 = vcvt.s32.f32 %v101
  %v134 = vcvt.s32.f32 %v102
  %v135 = vcvt.s32.f32 %v103
  %v136 = vcvt.s32.f32 %v104
  %v137 = vcvt.s32.f32 %v105
  %v138 = vcvt.s32.f32 %v106
  %v139 = vcvt.s32.f32 %v107
  %v140 = vcvt.s32.f32 %v108
  %v141 = vcvt.s32.f32 %v109
  %v142 = vcvt.s32.f32 %v110
  %v143 = vcvt.s32.f32 %v111
  %v144 = vcvt.s32.f32 %v112
  %v145 = vcvt.s32.f32 %v113
  %v146 = vld [vmem:[%s1] sm:$0xff]
  %v147 = vld [vmem:[%s1 + $0x8] sm:$0xff]
  %148 = vmatprep.subr.mxu0 %v115
  %149 = vmatpush1.msra.mxu0 %v114
  %150 = vmatprep.subr.mxu0 %v117
  %151 = vmatpush1.msra.mxu0 %v116
  %152 = vmatprep.subr.mxu0 %v119
  %153 = vmatpush1.msra.mxu0 %v118
  %154 = vmatprep.subr.mxu0 %v121
  %155 = vmatpush1.msra.mxu0 %v120
  %156 = vmatprep.subr.mxu0 %v123
  %157 = vmatpush1.msra.mxu0 %v122
  %158 = vmatprep.subr.mxu0 %v125
  %159 = vmatpush1.msra.mxu0 %v124
  %160 = vmatprep.subr.mxu0 %v127
  %161 = vmatpush1.msra.mxu0 %v126
  %162 = vmatprep.subr.mxu0 %v129
  %163 = vmatpush1.msra.mxu0 %v128
  %164 = vmatprep.subr.mxu0 %v131
  %165 = vmatpush1.msra.mxu0 %v130
  %166 = vmatprep.subr.mxu0 %v133
  %167 = vmatpush1.msra.mxu0 %v132
  %168 = vmatprep.subr.mxu0 %v135
  %169 = vmatpush1.msra.mxu0 %v134
  %170 = vmatprep.subr.mxu0 %v137
  %171 = vmatpush1.msra.mxu0 %v136
  %172 = vmatprep.subr.mxu0 %v139
  %173 = vmatpush1.msra.mxu0 %v138
  %174 = vmatprep.subr.mxu0 %v141
  %175 = vmatpush1.msra.mxu0 %v140
  %176 = vmatprep.subr.mxu0 %v143
  %177 = vmatpush1.msra.mxu0 %v142
  %178 = vmatprep.subr.mxu0 %v145
  %179 = vmatpush1.msra.mxu0 %v144
  %180 = vmatprep.subr.mxu0 0.0
  %181 = vmatpush1.msra.mxu0 0.0
  %182 = vmatprep.subr.mxu0 0.0
  %183 = vmatpush1.msra.mxu0 0.0
  %184 = vmatprep.subr.mxu0 0.0
  %185 = vmatpush1.msra.mxu0 0.0
  %186 = vmatprep.subr.mxu0 0.0
  %187 = vmatpush1.msra.mxu0 0.0
  %188 = vmatprep.subr.mxu0 0.0
  %189 = vmatpush1.msra.mxu0 0.0
  %190 = vmatprep.subr.mxu0 0.0
  %191 = vmatpush1.msra.mxu0 0.0
  %192 = vmatprep.subr.mxu0 0.0
  %193 = vmatpush1.msra.mxu0 0.0
  %194 = vmatprep.subr.mxu0 0.0
  %195 = vmatpush1.msra.mxu0 0.0
  %196 = vmatprep.subr.mxu0 0.0
  %197 = vmatpush1.msra.mxu0 0.0
  %198 = vmatprep.subr.mxu0 0.0
  %199 = vmatpush1.msra.mxu0 0.0
  %200 = vmatprep.subr.mxu0 0.0
  %201 = vmatpush1.msra.mxu0 0.0
  %202 = vmatprep.subr.mxu0 0.0
  %203 = vmatpush1.msra.mxu0 0.0
  %204 = vmatprep.subr.mxu0 0.0
  %205 = vmatpush1.msra.mxu0 0.0
  %206 = vmatprep.subr.mxu0 0.0
  %207 = vmatpush1.msra.mxu0 0.0
  %208 = vmatprep.subr.mxu0 0.0
  %209 = vmatpush1.msra.mxu0 0.0
  %210 = vmatprep.subr.mxu0 0.0
  %211 = vmatpush1.msra.mxu0 0.0
  %212 = vmatprep.mubr.f32.mxu0 0.0
  %213 = vmatmul.mubr.f32.gmra.mrb[0].mxu0 %v146
  %v214 = vpop.f32.mrb[0].mxu0
  %v215 = vadd.f32 0.0, %v214
  %v216 = vpop.f32.mrb[0].mxu0
  %v217 = vadd.f32 0.0, %v216
  %218 = vmatprep.mubr.f32.mxu0 0.0
  %219 = vmatmul.mubr.f32.gmra.mrb[0].mxu0 %v147
  %v220 = vpop.f32.mrb[0].mxu0
  %v221 = vadd.f32 0.0, %v220
  %v222 = vpop.f32.mrb[0].mxu0
  %v223 = vadd.f32 0.0, %v222
  %224 = vdwg.mxu0
  %v225 = vlaneseq
  %v226 = vshrl.u32 %v225, 7
  %v227 = vsub.s32 1, %v226
  %v228 = vrot.slane %v23, %v227
  %v229 = vlaneseq
  %v230 = vshrl.u32 %v229, 7
  %v231 = vsub.s32 1, %v230
  %v232 = vrot.slane %v24, %v231
  %vm233 = vcmp.eq.s32.totalorder %v26, %v228
  %vm234 = vcmp.eq.s32.totalorder %v26, %v232
  %vm235 = vcmp.eq.s32.totalorder %v27, %v228
  %vm236 = vcmp.eq.s32.totalorder %v27, %v232
  %vm237 = vcmp.eq.s32.totalorder %v28, %v228
  %vm238 = vcmp.eq.s32.totalorder %v28, %v232
  %vm239 = vcmp.eq.s32.totalorder %v29, %v228
  %vm240 = vcmp.eq.s32.totalorder %v29, %v232
  %vm241 = vcmp.eq.s32.totalorder %v30, %v228
  %vm242 = vcmp.eq.s32.totalorder %v30, %v232
  %vm243 = vcmp.eq.s32.totalorder %v31, %v228
  %vm244 = vcmp.eq.s32.totalorder %v31, %v232
  %vm245 = vcmp.eq.s32.totalorder %v32, %v228
  %vm246 = vcmp.eq.s32.totalorder %v32, %v232
  %vm247 = vcmp.eq.s32.totalorder %v33, %v228
  %vm248 = vcmp.eq.s32.totalorder %v33, %v232
  %vm249 = vcmp.eq.s32.totalorder %v34, %v228
  %vm250 = vcmp.eq.s32.totalorder %v34, %v232
  %vm251 = vcmp.eq.s32.totalorder %v35, %v228
  %vm252 = vcmp.eq.s32.totalorder %v35, %v232
  %vm253 = vcmp.eq.s32.totalorder %v36, %v228
  %vm254 = vcmp.eq.s32.totalorder %v36, %v232
  %vm255 = vcmp.eq.s32.totalorder %v37, %v228
  %vm256 = vcmp.eq.s32.totalorder %v37, %v232
  %vm257 = vcmp.eq.s32.totalorder %v38, %v228
  %vm258 = vcmp.eq.s32.totalorder %v38, %v232
  %vm259 = vcmp.eq.s32.totalorder %v39, %v228
  %vm260 = vcmp.eq.s32.totalorder %v39, %v232
  %vm261 = vcmp.eq.s32.totalorder %v40, %v228
  %vm262 = vcmp.eq.s32.totalorder %v40, %v232
  %vm263 = vcmp.eq.s32.totalorder %v41, %v228
  %vm264 = vcmp.eq.s32.totalorder %v41, %v232
  %v265 = vsel %vm233, 1, 0
  %v266 = vsel %vm234, 1, 0
  %v267 = vsel %vm235, 1, 0
  %v268 = vsel %vm236, 1, 0
  %v269 = vsel %vm237, 1, 0
  %v270 = vsel %vm238, 1, 0
  %v271 = vsel %vm239, 1, 0
  %v272 = vsel %vm240, 1, 0
  %v273 = vsel %vm241, 1, 0
  %v274 = vsel %vm242, 1, 0
  %v275 = vsel %vm243, 1, 0
  %v276 = vsel %vm244, 1, 0
  %v277 = vsel %vm245, 1, 0
  %v278 = vsel %vm246, 1, 0
  %v279 = vsel %vm247, 1, 0
  %v280 = vsel %vm248, 1, 0
  %v281 = vsel %vm249, 1, 0
  %v282 = vsel %vm250, 1, 0
  %v283 = vsel %vm251, 1, 0
  %v284 = vsel %vm252, 1, 0
  %v285 = vsel %vm253, 1, 0
  %v286 = vsel %vm254, 1, 0
  %v287 = vsel %vm255, 1, 0
  %v288 = vsel %vm256, 1, 0
  %v289 = vsel %vm257, 1, 0
  %v290 = vsel %vm258, 1, 0
  %v291 = vsel %vm259, 1, 0
  %v292 = vsel %vm260, 1, 0
  %v293 = vsel %vm261, 1, 0
  %v294 = vsel %vm262, 1, 0
  %v295 = vsel %vm263, 1, 0
  %v296 = vsel %vm264, 1, 0
  %v297 = vcvt.s32.f32 %v265
  %v298 = vcvt.s32.f32 %v266
  %v299 = vcvt.s32.f32 %v267
  %v300 = vcvt.s32.f32 %v268
  %v301 = vcvt.s32.f32 %v269
  %v302 = vcvt.s32.f32 %v270
  %v303 = vcvt.s32.f32 %v271
  %v304 = vcvt.s32.f32 %v272
  %v305 = vcvt.s32.f32 %v273
  %v306 = vcvt.s32.f32 %v274
  %v307 = vcvt.s32.f32 %v275
  %v308 = vcvt.s32.f32 %v276
  %v309 = vcvt.s32.f32 %v277
  %v310 = vcvt.s32.f32 %v278
  %v311 = vcvt.s32.f32 %v279
  %v312 = vcvt.s32.f32 %v280
  %v313 = vcvt.s32.f32 %v281
  %v314 = vcvt.s32.f32 %v282
  %v315 = vcvt.s32.f32 %v283
  %v316 = vcvt.s32.f32 %v284
  %v317 = vcvt.s32.f32 %v285
  %v318 = vcvt.s32.f32 %v286
  %v319 = vcvt.s32.f32 %v287
  %v320 = vcvt.s32.f32 %v288
  %v321 = vcvt.s32.f32 %v289
  %v322 = vcvt.s32.f32 %v290
  %v323 = vcvt.s32.f32 %v291
  %v324 = vcvt.s32.f32 %v292
  %v325 = vcvt.s32.f32 %v293
  %v326 = vcvt.s32.f32 %v294
  %v327 = vcvt.s32.f32 %v295
  %v328 = vcvt.s32.f32 %v296
  %329 = vmatprep.subr.mxu0 %v298
  %330 = vmatpush1.msra.mxu0 %v297
  %331 = vmatprep.subr.mxu0 %v300
  %332 = vmatpush1.msra.mxu0 %v299
  %333 = vmatprep.subr.mxu0 %v302
  %334 = vmatpush1.msra.mxu0 %v301
  %335 = vmatprep.subr.mxu0 %v304
  %336 = vmatpush1.msra.mxu0 %v303
  %337 = vmatprep.subr.mxu0 %v306
  %338 = vmatpush1.msra.mxu0 %v305
  %339 = vmatprep.subr.mxu0 %v308
  %340 = vmatpush1.msra.mxu0 %v307
  %341 = vmatprep.subr.mxu0 %v310
  %342 = vmatpush1.msra.mxu0 %v309
  %343 = vmatprep.subr.mxu0 %v312
  %344 = vmatpush1.msra.mxu0 %v311
  %345 = vmatprep.subr.mxu0 %v314
  %346 = vmatpush1.msra.mxu0 %v313
  %347 = vmatprep.subr.mxu0 %v316
  %348 = vmatpush1.msra.mxu0 %v315
  %349 = vmatprep.subr.mxu0 %v318
  %350 = vmatpush1.msra.mxu0 %v317
  %351 = vmatprep.subr.mxu0 %v320
  %352 = vmatpush1.msra.mxu0 %v319
  %353 = vmatprep.subr.mxu0 %v322
  %354 = vmatpush1.msra.mxu0 %v321
  %355 = vmatprep.subr.mxu0 %v324
  %356 = vmatpush1.msra.mxu0 %v323
  %357 = vmatprep.subr.mxu0 %v326
  %358 = vmatpush1.msra.mxu0 %v325
  %359 = vmatprep.subr.mxu0 %v328
  %360 = vmatpush1.msra.mxu0 %v327
  %361 = vmatprep.subr.mxu0 0.0
  %362 = vmatpush1.msra.mxu0 0.0
  %363 = vmatprep.subr.mxu0 0.0
  %364 = vmatpush1.msra.mxu0 0.0
  %365 = vmatprep.subr.mxu0 0.0
  %366 = vmatpush1.msra.mxu0 0.0
  %367 = vmatprep.subr.mxu0 0.0
  %368 = vmatpush1.msra.mxu0 0.0
  %369 = vmatprep.subr.mxu0 0.0
  %370 = vmatpush1.msra.mxu0 0.0
  %371 = vmatprep.subr.mxu0 0.0
  %372 = vmatpush1.msra.mxu0 0.0
  %373 = vmatprep.subr.mxu0 0.0
  %374 = vmatpush1.msra.mxu0 0.0
  %375 = vmatprep.subr.mxu0 0.0
  %376 = vmatpush1.msra.mxu0 0.0
  %377 = vmatprep.subr.mxu0 0.0
  %378 = vmatpush1.msra.mxu0 0.0
  %379 = vmatprep.subr.mxu0 0.0
  %380 = vmatpush1.msra.mxu0 0.0
  %381 = vmatprep.subr.mxu0 0.0
  %382 = vmatpush1.msra.mxu0 0.0
  %383 = vmatprep.subr.mxu0 0.0
  %384 = vmatpush1.msra.mxu0 0.0
  %385 = vmatprep.subr.mxu0 0.0
  %386 = vmatpush1.msra.mxu0 0.0
  %387 = vmatprep.subr.mxu0 0.0
  %388 = vmatpush1.msra.mxu0 0.0
  %389 = vmatprep.subr.mxu0 0.0
  %390 = vmatpush1.msra.mxu0 0.0
  %391 = vmatprep.subr.mxu0 0.0
  %392 = vmatpush1.msra.mxu0 0.0
  %393 = vmatprep.mubr.f32.mxu0 0.0
  %394 = vmatmul.mubr.f32.gmra.mrb[0].mxu0 %v146
  %v395 = vpop.f32.mrb[0].mxu0
  %v396 = vadd.f32 0.0, %v395
  %v397 = vpop.f32.mrb[0].mxu0
  %v398 = vadd.f32 0.0, %v397
  %399 = vmatprep.mubr.f32.mxu0 0.0
  %400 = vmatmul.mubr.f32.gmra.mrb[0].mxu0 %v147
  %v401 = vpop.f32.mrb[0].mxu0
  %v402 = vadd.f32 0.0, %v401
  %v403 = vpop.f32.mrb[0].mxu0
  %v404 = vadd.f32 0.0, %v403
  %405 = vdwg.mxu0
  %v406 = vlaneseq
  %v407 = vshrl.u32 %v406, 7
  %v408 = vsub.s32 2, %v407
  %v409 = vrot.slane %v23, %v408
  %v410 = vlaneseq
  %v411 = vshrl.u32 %v410, 7
  %v412 = vsub.s32 2, %v411
  %v413 = vrot.slane %v24, %v412
  %vm414 = vcmp.eq.s32.totalorder %v26, %v409
  %vm415 = vcmp.eq.s32.totalorder %v26, %v413
  %vm416 = vcmp.eq.s32.totalorder %v27, %v409
  %vm417 = vcmp.eq.s32.totalorder %v27, %v413
  %vm418 = vcmp.eq.s32.totalorder %v28, %v409
  %vm419 = vcmp.eq.s32.totalorder %v28, %v413
  %vm420 = vcmp.eq.s32.totalorder %v29, %v409
  %vm421 = vcmp.eq.s32.totalorder %v29, %v413
  %vm422 = vcmp.eq.s32.totalorder %v30, %v409
  %vm423 = vcmp.eq.s32.totalorder %v30, %v413
  %vm424 = vcmp.eq.s32.totalorder %v31, %v409
  %vm425 = vcmp.eq.s32.totalorder %v31, %v413
  %vm426 = vcmp.eq.s32.totalorder %v32, %v409
  %vm427 = vcmp.eq.s32.totalorder %v32, %v413
  %vm428 = vcmp.eq.s32.totalorder %v33, %v409
  %vm429 = vcmp.eq.s32.totalorder %v33, %v413
  %vm430 = vcmp.eq.s32.totalorder %v34, %v409
  %vm431 = vcmp.eq.s32.totalorder %v34, %v413
  %vm432 = vcmp.eq.s32.totalorder %v35, %v409
  %vm433 = vcmp.eq.s32.totalorder %v35, %v413
  %vm434 = vcmp.eq.s32.totalorder %v36, %v409
  %vm435 = vcmp.eq.s32.totalorder %v36, %v413
  %vm436 = vcmp.eq.s32.totalorder %v37, %v409
  %vm437 = vcmp.eq.s32.totalorder %v37, %v413
  %vm438 = vcmp.eq.s32.totalorder %v38, %v409
  %vm439 = vcmp.eq.s32.totalorder %v38, %v413
  %vm440 = vcmp.eq.s32.totalorder %v39, %v409
  %vm441 = vcmp.eq.s32.totalorder %v39, %v413
  %vm442 = vcmp.eq.s32.totalorder %v40, %v409
  %vm443 = vcmp.eq.s32.totalorder %v40, %v413
  %vm444 = vcmp.eq.s32.totalorder %v41, %v409
  %vm445 = vcmp.eq.s32.totalorder %v41, %v413
  %v446 = vsel %vm414, 1, 0
  %v447 = vsel %vm415, 1, 0
  %v448 = vsel %vm416, 1, 0
  %v449 = vsel %vm417, 1, 0
  %v450 = vsel %vm418, 1, 0
  %v451 = vsel %vm419, 1, 0
  %v452 = vsel %vm420, 1, 0
  %v453 = vsel %vm421, 1, 0
  %v454 = vsel %vm422, 1, 0
  %v455 = vsel %vm423, 1, 0
  %v456 = vsel %vm424, 1, 0
  %v457 = vsel %vm425, 1, 0
  %v458 = vsel %vm426, 1, 0
  %v459 = vsel %vm427, 1, 0
  %v460 = vsel %vm428, 1, 0
  %v461 = vsel %vm429, 1, 0
  %v462 = vsel %vm430, 1, 0
  %v463 = vsel %vm431, 1, 0
  %v464 = vsel %vm432, 1, 0
  %v465 = vsel %vm433, 1, 0
  %v466 = vsel %vm434, 1, 0
  %v467 = vsel %vm435, 1, 0
  %v468 = vsel %vm436, 1, 0
  %v469 = vsel %vm437, 1, 0
  %v470 = vsel %vm438, 1, 0
  %v471 = vsel %vm439, 1, 0
  %v472 = vsel %vm440, 1, 0
  %v473 = vsel %vm441, 1, 0
  %v474 = vsel %vm442, 1, 0
  %v475 = vsel %vm443, 1, 0
  %v476 = vsel %vm444, 1, 0
  %v477 = vsel %vm445, 1, 0
  %v478 = vcvt.s32.f32 %v446
  %v479 = vcvt.s32.f32 %v447
  %v480 = vcvt.s32.f32 %v448
  %v481 = vcvt.s32.f32 %v449
  %v482 = vcvt.s32.f32 %v450
  %v483 = vcvt.s32.f32 %v451
  %v484 = vcvt.s32.f32 %v452
  %v485 = vcvt.s32.f32 %v453
  %v486 = vcvt.s32.f32 %v454
  %v487 = vcvt.s32.f32 %v455
  %v488 = vcvt.s32.f32 %v456
  %v489 = vcvt.s32.f32 %v457
  %v490 = vcvt.s32.f32 %v458
  %v491 = vcvt.s32.f32 %v459
  %v492 = vcvt.s32.f32 %v460
  %v493 = vcvt.s32.f32 %v461
  %v494 = vcvt.s32.f32 %v462
  %v495 = vcvt.s32.f32 %v463
  %v496 = vcvt.s32.f32 %v464
  %v497 = vcvt.s32.f32 %v465
  %v498 = vcvt.s32.f32 %v466
  %v499 = vcvt.s32.f32 %v467
  %v500 = vcvt.s32.f32 %v468
  %v501 = vcvt.s32.f32 %v469
  %v502 = vcvt.s32.f32 %v470
  %v503 = vcvt.s32.f32 %v471
  %v504 = vcvt.s32.f32 %v472
  %v505 = vcvt.s32.f32 %v473
  %v506 = vcvt.s32.f32 %v474
  %v507 = vcvt.s32.f32 %v475
  %v508 = vcvt.s32.f32 %v476
  %v509 = vcvt.s32.f32 %v477
  %510 = vmatprep.subr.mxu0 %v479
  %511 = vmatpush1.msra.mxu0 %v478
  %512 = vmatprep.subr.mxu0 %v481
  %513 = vmatpush1.msra.mxu0 %v480
  %514 = vmatprep.subr.mxu0 %v483
  %515 = vmatpush1.msra.mxu0 %v482
  %516 = vmatprep.subr.mxu0 %v485
  %517 = vmatpush1.msra.mxu0 %v484
  %518 = vmatprep.subr.mxu0 %v487
  %519 = vmatpush1.msra.mxu0 %v486
  %520 = vmatprep.subr.mxu0 %v489
  %521 = vmatpush1.msra.mxu0 %v488
  %522 = vmatprep.subr.mxu0 %v491
  %523 = vmatpush1.msra.mxu0 %v490
  %524 = vmatprep.subr.mxu0 %v493
  %525 = vmatpush1.msra.mxu0 %v492
  %526 = vmatprep.subr.mxu0 %v495
  %527 = vmatpush1.msra.mxu0 %v494
  %528 = vmatprep.subr.mxu0 %v497
  %529 = vmatpush1.msra.mxu0 %v496
  %530 = vmatprep.subr.mxu0 %v499
  %531 = vmatpush1.msra.mxu0 %v498
  %532 = vmatprep.subr.mxu0 %v501
  %533 = vmatpush1.msra.mxu0 %v500
  %534 = vmatprep.subr.mxu0 %v503
  %535 = vmatpush1.msra.mxu0 %v502
  %536 = vmatprep.subr.mxu0 %v505
  %537 = vmatpush1.msra.mxu0 %v504
  %538 = vmatprep.subr.mxu0 %v507
  %539 = vmatpush1.msra.mxu0 %v506
  %540 = vmatprep.subr.mxu0 %v509
  %541 = vmatpush1.msra.mxu0 %v508
  %542 = vmatprep.subr.mxu0 0.0
  %543 = vmatpush1.msra.mxu0 0.0
  %544 = vmatprep.subr.mxu0 0.0
  %545 = vmatpush1.msra.mxu0 0.0
  %546 = vmatprep.subr.mxu0 0.0
  %547 = vmatpush1.msra.mxu0 0.0
  %548 = vmatprep.subr.mxu0 0.0
  %549 = vmatpush1.msra.mxu0 0.0
  %550 = vmatprep.subr.mxu0 0.0
  %551 = vmatpush1.msra.mxu0 0.0
  %552 = vmatprep.subr.mxu0 0.0
  %553 = vmatpush1.msra.mxu0 0.0
  %554 = vmatprep.subr.mxu0 0.0
  %555 = vmatpush1.msra.mxu0 0.0
  %556 = vmatprep.subr.mxu0 0.0
  %557 = vmatpush1.msra.mxu0 0.0
  %558 = vmatprep.subr.mxu0 0.0
  %559 = vmatpush1.msra.mxu0 0.0
  %560 = vmatprep.subr.mxu0 0.0
  %561 = vmatpush1.msra.mxu0 0.0
  %562 = vmatprep.subr.mxu0 0.0
  %563 = vmatpush1.msra.mxu0 0.0
  %564 = vmatprep.subr.mxu0 0.0
  %565 = vmatpush1.msra.mxu0 0.0
  %566 = vmatprep.subr.mxu0 0.0
  %567 = vmatpush1.msra.mxu0 0.0
  %568 = vmatprep.subr.mxu0 0.0
  %569 = vmatpush1.msra.mxu0 0.0
  %570 = vmatprep.subr.mxu0 0.0
  %571 = vmatpush1.msra.mxu0 0.0
  %572 = vmatprep.subr.mxu0 0.0
  %573 = vmatpush1.msra.mxu0 0.0
  %574 = vmatprep.mubr.f32.mxu0 0.0
  %575 = vmatmul.mubr.f32.gmra.mrb[0].mxu0 %v146
  %v576 = vpop.f32.mrb[0].mxu0
  %v577 = vadd.f32 0.0, %v576
  %v578 = vpop.f32.mrb[0].mxu0
  %v579 = vadd.f32 0.0, %v578
  %580 = vmatprep.mubr.f32.mxu0 0.0
  %581 = vmatmul.mubr.f32.gmra.mrb[0].mxu0 %v147
  %v582 = vpop.f32.mrb[0].mxu0
  %v583 = vadd.f32 0.0, %v582
  %v584 = vpop.f32.mrb[0].mxu0
  %v585 = vadd.f32 0.0, %v584
  %586 = vdwg.mxu0
  %v587 = vlaneseq
  %v588 = vshrl.u32 %v587, 7
  %v589 = vsub.s32 3, %v588
  %v590 = vrot.slane %v23, %v589
  %v591 = vlaneseq
  %v592 = vshrl.u32 %v591, 7
  %v593 = vsub.s32 3, %v592
  %v594 = vrot.slane %v24, %v593
  %vm595 = vcmp.eq.s32.totalorder %v26, %v590
  %vm596 = vcmp.eq.s32.totalorder %v26, %v594
  %vm597 = vcmp.eq.s32.totalorder %v27, %v590
  %vm598 = vcmp.eq.s32.totalorder %v27, %v594
  %vm599 = vcmp.eq.s32.totalorder %v28, %v590
  %vm600 = vcmp.eq.s32.totalorder %v28, %v594
  %vm601 = vcmp.eq.s32.totalorder %v29, %v590
  %vm602 = vcmp.eq.s32.totalorder %v29, %v594
  %vm603 = vcmp.eq.s32.totalorder %v30, %v590
  %vm604 = vcmp.eq.s32.totalorder %v30, %v594
  %vm605 = vcmp.eq.s32.totalorder %v31, %v590
  %vm606 = vcmp.eq.s32.totalorder %v31, %v594
  %vm607 = vcmp.eq.s32.totalorder %v32, %v590
  %vm608 = vcmp.eq.s32.totalorder %v32, %v594
  %vm609 = vcmp.eq.s32.totalorder %v33, %v590
  %vm610 = vcmp.eq.s32.totalorder %v33, %v594
  %vm611 = vcmp.eq.s32.totalorder %v34, %v590
  %vm612 = vcmp.eq.s32.totalorder %v34, %v594
  %vm613 = vcmp.eq.s32.totalorder %v35, %v590
  %vm614 = vcmp.eq.s32.totalorder %v35, %v594
  %vm615 = vcmp.eq.s32.totalorder %v36, %v590
  %vm616 = vcmp.eq.s32.totalorder %v36, %v594
  %vm617 = vcmp.eq.s32.totalorder %v37, %v590
  %vm618 = vcmp.eq.s32.totalorder %v37, %v594
  %vm619 = vcmp.eq.s32.totalorder %v38, %v590
  %vm620 = vcmp.eq.s32.totalorder %v38, %v594
  %vm621 = vcmp.eq.s32.totalorder %v39, %v590
  %vm622 = vcmp.eq.s32.totalorder %v39, %v594
  %vm623 = vcmp.eq.s32.totalorder %v40, %v590
  %vm624 = vcmp.eq.s32.totalorder %v40, %v594
  %vm625 = vcmp.eq.s32.totalorder %v41, %v590
  %vm626 = vcmp.eq.s32.totalorder %v41, %v594
  %v627 = vsel %vm595, 1, 0
  %v628 = vsel %vm596, 1, 0
  %v629 = vsel %vm597, 1, 0
  %v630 = vsel %vm598, 1, 0
  %v631 = vsel %vm599, 1, 0
  %v632 = vsel %vm600, 1, 0
  %v633 = vsel %vm601, 1, 0
  %v634 = vsel %vm602, 1, 0
  %v635 = vsel %vm603, 1, 0
  %v636 = vsel %vm604, 1, 0
  %v637 = vsel %vm605, 1, 0
  %v638 = vsel %vm606, 1, 0
  %v639 = vsel %vm607, 1, 0
  %v640 = vsel %vm608, 1, 0
  %v641 = vsel %vm609, 1, 0
  %v642 = vsel %vm610, 1, 0
  %v643 = vsel %vm611, 1, 0
  %v644 = vsel %vm612, 1, 0
  %v645 = vsel %vm613, 1, 0
  %v646 = vsel %vm614, 1, 0
  %v647 = vsel %vm615, 1, 0
  %v648 = vsel %vm616, 1, 0
  %v649 = vsel %vm617, 1, 0
  %v650 = vsel %vm618, 1, 0
  %v651 = vsel %vm619, 1, 0
  %v652 = vsel %vm620, 1, 0
  %v653 = vsel %vm621, 1, 0
  %v654 = vsel %vm622, 1, 0
  %v655 = vsel %vm623, 1, 0
  %v656 = vsel %vm624, 1, 0
  %v657 = vsel %vm625, 1, 0
  %v658 = vsel %vm626, 1, 0
  %v659 = vcvt.s32.f32 %v627
  %v660 = vcvt.s32.f32 %v628
  %v661 = vcvt.s32.f32 %v629
  %v662 = vcvt.s32.f32 %v630
  %v663 = vcvt.s32.f32 %v631
  %v664 = vcvt.s32.f32 %v632
  %v665 = vcvt.s32.f32 %v633
  %v666 = vcvt.s32.f32 %v634
  %v667 = vcvt.s32.f32 %v635
  %v668 = vcvt.s32.f32 %v636
  %v669 = vcvt.s32.f32 %v637
  %v670 = vcvt.s32.f32 %v638
  %v671 = vcvt.s32.f32 %v639
  %v672 = vcvt.s32.f32 %v640
  %v673 = vcvt.s32.f32 %v641
  %v674 = vcvt.s32.f32 %v642
  %v675 = vcvt.s32.f32 %v643
  %v676 = vcvt.s32.f32 %v644
  %v677 = vcvt.s32.f32 %v645
  %v678 = vcvt.s32.f32 %v646
  %v679 = vcvt.s32.f32 %v647
  %v680 = vcvt.s32.f32 %v648
  %v681 = vcvt.s32.f32 %v649
  %v682 = vcvt.s32.f32 %v650
  %v683 = vcvt.s32.f32 %v651
  %v684 = vcvt.s32.f32 %v652
  %v685 = vcvt.s32.f32 %v653
  %v686 = vcvt.s32.f32 %v654
  %v687 = vcvt.s32.f32 %v655
  %v688 = vcvt.s32.f32 %v656
  %v689 = vcvt.s32.f32 %v657
  %v690 = vcvt.s32.f32 %v658
  %691 = vmatprep.subr.mxu0 %v660
  %692 = vmatpush1.msra.mxu0 %v659
  %693 = vmatprep.subr.mxu0 %v662
  %694 = vmatpush1.msra.mxu0 %v661
  %695 = vmatprep.subr.mxu0 %v664
  %696 = vmatpush1.msra.mxu0 %v663
  %697 = vmatprep.subr.mxu0 %v666
  %698 = vmatpush1.msra.mxu0 %v665
  %699 = vmatprep.subr.mxu0 %v668
  %700 = vmatpush1.msra.mxu0 %v667
  %701 = vmatprep.subr.mxu0 %v670
  %702 = vmatpush1.msra.mxu0 %v669
  %703 = vmatprep.subr.mxu0 %v672
  %704 = vmatpush1.msra.mxu0 %v671
  %705 = vmatprep.subr.mxu0 %v674
  %706 = vmatpush1.msra.mxu0 %v673
  %707 = vmatprep.subr.mxu0 %v676
  %708 = vmatpush1.msra.mxu0 %v675
  %709 = vmatprep.subr.mxu0 %v678
  %710 = vmatpush1.msra.mxu0 %v677
  %711 = vmatprep.subr.mxu0 %v680
  %712 = vmatpush1.msra.mxu0 %v679
  %713 = vmatprep.subr.mxu0 %v682
  %714 = vmatpush1.msra.mxu0 %v681
  %715 = vmatprep.subr.mxu0 %v684
  %716 = vmatpush1.msra.mxu0 %v683
  %717 = vmatprep.subr.mxu0 %v686
  %718 = vmatpush1.msra.mxu0 %v685
  %719 = vmatprep.subr.mxu0 %v688
  %720 = vmatpush1.msra.mxu0 %v687
  %721 = vmatprep.subr.mxu0 %v690
  %722 = vmatpush1.msra.mxu0 %v689
  %723 = vmatprep.subr.mxu0 0.0
  %724 = vmatpush1.msra.mxu0 0.0
  %725 = vmatprep.subr.mxu0 0.0
  %726 = vmatpush1.msra.mxu0 0.0
  %727 = vmatprep.subr.mxu0 0.0
  %728 = vmatpush1.msra.mxu0 0.0
  %729 = vmatprep.subr.mxu0 0.0
  %730 = vmatpush1.msra.mxu0 0.0
  %731 = vmatprep.subr.mxu0 0.0
  %732 = vmatpush1.msra.mxu0 0.0
  %733 = vmatprep.subr.mxu0 0.0
  %734 = vmatpush1.msra.mxu0 0.0
  %735 = vmatprep.subr.mxu0 0.0
  %736 = vmatpush1.msra.mxu0 0.0
  %737 = vmatprep.subr.mxu0 0.0
  %738 = vmatpush1.msra.mxu0 0.0
  %739 = vmatprep.subr.mxu0 0.0
  %740 = vmatpush1.msra.mxu0 0.0
  %741 = vmatprep.subr.mxu0 0.0
  %742 = vmatpush1.msra.mxu0 0.0
  %743 = vmatprep.subr.mxu0 0.0
  %744 = vmatpush1.msra.mxu0 0.0
  %745 = vmatprep.subr.mxu0 0.0
  %746 = vmatpush1.msra.mxu0 0.0
  %747 = vmatprep.subr.mxu0 0.0
  %748 = vmatpush1.msra.mxu0 0.0
  %749 = vmatprep.subr.mxu0 0.0
  %750 = vmatpush1.msra.mxu0 0.0
  %751 = vmatprep.subr.mxu0 0.0
  %752 = vmatpush1.msra.mxu0 0.0
  %753 = vmatprep.subr.mxu0 0.0
  %754 = vmatpush1.msra.mxu0 0.0
  %755 = vmatprep.mubr.f32.mxu0 0.0
  %756 = vmatmul.mubr.f32.gmra.mrb[0].mxu0 %v146
  %v757 = vpop.f32.mrb[0].mxu0
  %v758 = vadd.f32 0.0, %v757
  %v759 = vpop.f32.mrb[0].mxu0
  %v760 = vadd.f32 0.0, %v759
  %761 = vmatprep.mubr.f32.mxu0 0.0
  %762 = vmatmul.mubr.f32.gmra.mrb[0].mxu0 %v147
  %v763 = vpop.f32.mrb[0].mxu0
  %v764 = vadd.f32 0.0, %v763
  %v765 = vpop.f32.mrb[0].mxu0
  %v766 = vadd.f32 0.0, %v765
  %767 = vdwg.mxu0
  %v768 = vlaneseq
  %v769 = vshrl.u32 %v768, 7
  %v770 = vsub.s32 4, %v769
  %v771 = vrot.slane %v23, %v770
  %v772 = vlaneseq
  %v773 = vshrl.u32 %v772, 7
  %v774 = vsub.s32 4, %v773
  %v775 = vrot.slane %v24, %v774
  %vm776 = vcmp.eq.s32.totalorder %v26, %v771
  %vm777 = vcmp.eq.s32.totalorder %v26, %v775
  %vm778 = vcmp.eq.s32.totalorder %v27, %v771
  %vm779 = vcmp.eq.s32.totalorder %v27, %v775
  %vm780 = vcmp.eq.s32.totalorder %v28, %v771
  %vm781 = vcmp.eq.s32.totalorder %v28, %v775
  %vm782 = vcmp.eq.s32.totalorder %v29, %v771
  %vm783 = vcmp.eq.s32.totalorder %v29, %v775
  %vm784 = vcmp.eq.s32.totalorder %v30, %v771
  %vm785 = vcmp.eq.s32.totalorder %v30, %v775
  %vm786 = vcmp.eq.s32.totalorder %v31, %v771
  %vm787 = vcmp.eq.s32.totalorder %v31, %v775
  %vm788 = vcmp.eq.s32.totalorder %v32, %v771
  %vm789 = vcmp.eq.s32.totalorder %v32, %v775
  %vm790 = vcmp.eq.s32.totalorder %v33, %v771
  %vm791 = vcmp.eq.s32.totalorder %v33, %v775
  %vm792 = vcmp.eq.s32.totalorder %v34, %v771
  %vm793 = vcmp.eq.s32.totalorder %v34, %v775
  %vm794 = vcmp.eq.s32.totalorder %v35, %v771
  %vm795 = vcmp.eq.s32.totalorder %v35, %v775
  %vm796 = vcmp.eq.s32.totalorder %v36, %v771
  %vm797 = vcmp.eq.s32.totalorder %v36, %v775
  %vm798 = vcmp.eq.s32.totalorder %v37, %v771
  %vm799 = vcmp.eq.s32.totalorder %v37, %v775
  %vm800 = vcmp.eq.s32.totalorder %v38, %v771
  %vm801 = vcmp.eq.s32.totalorder %v38, %v775
  %vm802 = vcmp.eq.s32.totalorder %v39, %v771
  %vm803 = vcmp.eq.s32.totalorder %v39, %v775
  %vm804 = vcmp.eq.s32.totalorder %v40, %v771
  %vm805 = vcmp.eq.s32.totalorder %v40, %v775
  %vm806 = vcmp.eq.s32.totalorder %v41, %v771
  %vm807 = vcmp.eq.s32.totalorder %v41, %v775
  %v808 = vsel %vm776, 1, 0
  %v809 = vsel %vm777, 1, 0
  %v810 = vsel %vm778, 1, 0
  %v811 = vsel %vm779, 1, 0
  %v812 = vsel %vm780, 1, 0
  %v813 = vsel %vm781, 1, 0
  %v814 = vsel %vm782, 1, 0
  %v815 = vsel %vm783, 1, 0
  %v816 = vsel %vm784, 1, 0
  %v817 = vsel %vm785, 1, 0
  %v818 = vsel %vm786, 1, 0
  %v819 = vsel %vm787, 1, 0
  %v820 = vsel %vm788, 1, 0
  %v821 = vsel %vm789, 1, 0
  %v822 = vsel %vm790, 1, 0
  %v823 = vsel %vm791, 1, 0
  %v824 = vsel %vm792, 1, 0
  %v825 = vsel %vm793, 1, 0
  %v826 = vsel %vm794, 1, 0
  %v827 = vsel %vm795, 1, 0
  %v828 = vsel %vm796, 1, 0
  %v829 = vsel %vm797, 1, 0
  %v830 = vsel %vm798, 1, 0
  %v831 = vsel %vm799, 1, 0
  %v832 = vsel %vm800, 1, 0
  %v833 = vsel %vm801, 1, 0
  %v834 = vsel %vm802, 1, 0
  %v835 = vsel %vm803, 1, 0
  %v836 = vsel %vm804, 1, 0
  %v837 = vsel %vm805, 1, 0
  %v838 = vsel %vm806, 1, 0
  %v839 = vsel %vm807, 1, 0
  %v840 = vcvt.s32.f32 %v808
  %v841 = vcvt.s32.f32 %v809
  %v842 = vcvt.s32.f32 %v810
  %v843 = vcvt.s32.f32 %v811
  %v844 = vcvt.s32.f32 %v812
  %v845 = vcvt.s32.f32 %v813
  %v846 = vcvt.s32.f32 %v814
  %v847 = vcvt.s32.f32 %v815
  %v848 = vcvt.s32.f32 %v816
  %v849 = vcvt.s32.f32 %v817
  %v850 = vcvt.s32.f32 %v818
  %v851 = vcvt.s32.f32 %v819
  %v852 = vcvt.s32.f32 %v820
  %v853 = vcvt.s32.f32 %v821
  %v854 = vcvt.s32.f32 %v822
  %v855 = vcvt.s32.f32 %v823
  %v856 = vcvt.s32.f32 %v824
  %v857 = vcvt.s32.f32 %v825
  %v858 = vcvt.s32.f32 %v826
  %v859 = vcvt.s32.f32 %v827
  %v860 = vcvt.s32.f32 %v828
  %v861 = vcvt.s32.f32 %v829
  %v862 = vcvt.s32.f32 %v830
  %v863 = vcvt.s32.f32 %v831
  %v864 = vcvt.s32.f32 %v832
  %v865 = vcvt.s32.f32 %v833
  %v866 = vcvt.s32.f32 %v834
  %v867 = vcvt.s32.f32 %v835
  %v868 = vcvt.s32.f32 %v836
  %v869 = vcvt.s32.f32 %v837
  %v870 = vcvt.s32.f32 %v838
  %v871 = vcvt.s32.f32 %v839
  %872 = vmatprep.subr.mxu0 %v841
  %873 = vmatpush1.msra.mxu0 %v840
  %874 = vmatprep.subr.mxu0 %v843
  %875 = vmatpush1.msra.mxu0 %v842
  %876 = vmatprep.subr.mxu0 %v845
  %877 = vmatpush1.msra.mxu0 %v844
  %878 = vmatprep.subr.mxu0 %v847
  %879 = vmatpush1.msra.mxu0 %v846
  %880 = vmatprep.subr.mxu0 %v849
  %881 = vmatpush1.msra.mxu0 %v848
  %882 = vmatprep.subr.mxu0 %v851
  %883 = vmatpush1.msra.mxu0 %v850
  %884 = vmatprep.subr.mxu0 %v853
  %885 = vmatpush1.msra.mxu0 %v852
  %886 = vmatprep.subr.mxu0 %v855
  %887 = vmatpush1.msra.mxu0 %v854
  %888 = vmatprep.subr.mxu0 %v857
  %889 = vmatpush1.msra.mxu0 %v856
  %890 = vmatprep.subr.mxu0 %v859
  %891 = vmatpush1.msra.mxu0 %v858
  %892 = vmatprep.subr.mxu0 %v861
  %893 = vmatpush1.msra.mxu0 %v860
  %894 = vmatprep.subr.mxu0 %v863
  %895 = vmatpush1.msra.mxu0 %v862
  %896 = vmatprep.subr.mxu0 %v865
  %897 = vmatpush1.msra.mxu0 %v864
  %898 = vmatprep.subr.mxu0 %v867
  %899 = vmatpush1.msra.mxu0 %v866
  %900 = vmatprep.subr.mxu0 %v869
  %901 = vmatpush1.msra.mxu0 %v868
  %902 = vmatprep.subr.mxu0 %v871
  %903 = vmatpush1.msra.mxu0 %v870
  %904 = vmatprep.subr.mxu0 0.0
  %905 = vmatpush1.msra.mxu0 0.0
  %906 = vmatprep.subr.mxu0 0.0
  %907 = vmatpush1.msra.mxu0 0.0
  %908 = vmatprep.subr.mxu0 0.0
  %909 = vmatpush1.msra.mxu0 0.0
  %910 = vmatprep.subr.mxu0 0.0
  %911 = vmatpush1.msra.mxu0 0.0
  %912 = vmatprep.subr.mxu0 0.0
  %913 = vmatpush1.msra.mxu0 0.0
  %914 = vmatprep.subr.mxu0 0.0
  %915 = vmatpush1.msra.mxu0 0.0
  %916 = vmatprep.subr.mxu0 0.0
  %917 = vmatpush1.msra.mxu0 0.0
  %918 = vmatprep.subr.mxu0 0.0
  %919 = vmatpush1.msra.mxu0 0.0
  %920 = vmatprep.subr.mxu0 0.0
  %921 = vmatpush1.msra.mxu0 0.0
  %922 = vmatprep.subr.mxu0 0.0
  %923 = vmatpush1.msra.mxu0 0.0
  %924 = vmatprep.subr.mxu0 0.0
  %925 = vmatpush1.msra.mxu0 0.0
  %926 = vmatprep.subr.mxu0 0.0
  %927 = vmatpush1.msra.mxu0 0.0
  %928 = vmatprep.subr.mxu0 0.0
  %929 = vmatpush1.msra.mxu0 0.0
  %930 = vmatprep.subr.mxu0 0.0
  %931 = vmatpush1.msra.mxu0 0.0
  %932 = vmatprep.subr.mxu0 0.0
  %933 = vmatpush1.msra.mxu0 0.0
  %934 = vmatprep.subr.mxu0 0.0
  %935 = vmatpush1.msra.mxu0 0.0
  %936 = vmatprep.mubr.f32.mxu0 0.0
  %937 = vmatmul.mubr.f32.gmra.mrb[0].mxu0 %v146
  %v938 = vpop.f32.mrb[0].mxu0
  %v939 = vadd.f32 0.0, %v938
  %v940 = vpop.f32.mrb[0].mxu0
  %v941 = vadd.f32 0.0, %v940
  %942 = vmatprep.mubr.f32.mxu0 0.0
  %943 = vmatmul.mubr.f32.gmra.mrb[0].mxu0 %v147
  %v944 = vpop.f32.mrb[0].mxu0
  %v945 = vadd.f32 0.0, %v944
  %v946 = vpop.f32.mrb[0].mxu0
  %v947 = vadd.f32 0.0, %v946
  %948 = vdwg.mxu0
  %v949 = vlaneseq
  %v950 = vshrl.u32 %v949, 7
  %v951 = vsub.s32 5, %v950
  %v952 = vrot.slane %v23, %v951
  %v953 = vlaneseq
  %v954 = vshrl.u32 %v953, 7
  %v955 = vsub.s32 5, %v954
  %v956 = vrot.slane %v24, %v955
  %vm957 = vcmp.eq.s32.totalorder %v26, %v952
  %vm958 = vcmp.eq.s32.totalorder %v26, %v956
  %vm959 = vcmp.eq.s32.totalorder %v27, %v952
  %vm960 = vcmp.eq.s32.totalorder %v27, %v956
  %vm961 = vcmp.eq.s32.totalorder %v28, %v952
  %vm962 = vcmp.eq.s32.totalorder %v28, %v956
  %vm963 = vcmp.eq.s32.totalorder %v29, %v952
  %vm964 = vcmp.eq.s32.totalorder %v29, %v956
  %vm965 = vcmp.eq.s32.totalorder %v30, %v952
  %vm966 = vcmp.eq.s32.totalorder %v30, %v956
  %vm967 = vcmp.eq.s32.totalorder %v31, %v952
  %vm968 = vcmp.eq.s32.totalorder %v31, %v956
  %vm969 = vcmp.eq.s32.totalorder %v32, %v952
  %vm970 = vcmp.eq.s32.totalorder %v32, %v956
  %vm971 = vcmp.eq.s32.totalorder %v33, %v952
  %vm972 = vcmp.eq.s32.totalorder %v33, %v956
  %vm973 = vcmp.eq.s32.totalorder %v34, %v952
  %vm974 = vcmp.eq.s32.totalorder %v34, %v956
  %vm975 = vcmp.eq.s32.totalorder %v35, %v952
  %vm976 = vcmp.eq.s32.totalorder %v35, %v956
  %vm977 = vcmp.eq.s32.totalorder %v36, %v952
  %vm978 = vcmp.eq.s32.totalorder %v36, %v956
  %vm979 = vcmp.eq.s32.totalorder %v37, %v952
  %vm980 = vcmp.eq.s32.totalorder %v37, %v956
  %vm981 = vcmp.eq.s32.totalorder %v38, %v952
  %vm982 = vcmp.eq.s32.totalorder %v38, %v956
  %vm983 = vcmp.eq.s32.totalorder %v39, %v952
  %vm984 = vcmp.eq.s32.totalorder %v39, %v956
  %vm985 = vcmp.eq.s32.totalorder %v40, %v952
  %vm986 = vcmp.eq.s32.totalorder %v40, %v956
  %vm987 = vcmp.eq.s32.totalorder %v41, %v952
  %vm988 = vcmp.eq.s32.totalorder %v41, %v956
  %v989 = vsel %vm957, 1, 0
  %v990 = vsel %vm958, 1, 0
  %v991 = vsel %vm959, 1, 0
  %v992 = vsel %vm960, 1, 0
  %v993 = vsel %vm961, 1, 0
  %v994 = vsel %vm962, 1, 0
  %v995 = vsel %vm963, 1, 0
  %v996 = vsel %vm964, 1, 0
  %v997 = vsel %vm965, 1, 0
  %v998 = vsel %vm966, 1, 0
  %v999 = vsel %vm967, 1, 0
  %v1000 = vsel %vm968, 1, 0
  %v1001 = vsel %vm969, 1, 0
  %v1002 = vsel %vm970, 1, 0
  %v1003 = vsel %vm971, 1, 0
  %v1004 = vsel %vm972, 1, 0
  %v1005 = vsel %vm973, 1, 0
  %v1006 = vsel %vm974, 1, 0
  %v1007 = vsel %vm975, 1, 0
  %v1008 = vsel %vm976, 1, 0
  %v1009 = vsel %vm977, 1, 0
  %v1010 = vsel %vm978, 1, 0
  %v1011 = vsel %vm979, 1, 0
  %v1012 = vsel %vm980, 1, 0
  %v1013 = vsel %vm981, 1, 0
  %v1014 = vsel %vm982, 1, 0
  %v1015 = vsel %vm983, 1, 0
  %v1016 = vsel %vm984, 1, 0
  %v1017 = vsel %vm985, 1, 0
  %v1018 = vsel %vm986, 1, 0
  %v1019 = vsel %vm987, 1, 0
  %v1020 = vsel %vm988, 1, 0
  %v1021 = vcvt.s32.f32 %v989
  %v1022 = vcvt.s32.f32 %v990
  %v1023 = vcvt.s32.f32 %v991
  %v1024 = vcvt.s32.f32 %v992
  %v1025 = vcvt.s32.f32 %v993
  %v1026 = vcvt.s32.f32 %v994
  %v1027 = vcvt.s32.f32 %v995
  %v1028 = vcvt.s32.f32 %v996
  %v1029 = vcvt.s32.f32 %v997
  %v1030 = vcvt.s32.f32 %v998
  %v1031 = vcvt.s32.f32 %v999
  %v1032 = vcvt.s32.f32 %v1000
  %v1033 = vcvt.s32.f32 %v1001
  %v1034 = vcvt.s32.f32 %v1002
  %v1035 = vcvt.s32.f32 %v1003
  %v1036 = vcvt.s32.f32 %v1004
  %v1037 = vcvt.s32.f32 %v1005
  %v1038 = vcvt.s32.f32 %v1006
  %v1039 = vcvt.s32.f32 %v1007
  %v1040 = vcvt.s32.f32 %v1008
  %v1041 = vcvt.s32.f32 %v1009
  %v1042 = vcvt.s32.f32 %v1010
  %v1043 = vcvt.s32.f32 %v1011
  %v1044 = vcvt.s32.f32 %v1012
  %v1045 = vcvt.s32.f32 %v1013
  %v1046 = vcvt.s32.f32 %v1014
  %v1047 = vcvt.s32.f32 %v1015
  %v1048 = vcvt.s32.f32 %v1016
  %v1049 = vcvt.s32.f32 %v1017
  %v1050 = vcvt.s32.f32 %v1018
  %v1051 = vcvt.s32.f32 %v1019
  %v1052 = vcvt.s32.f32 %v1020
  %1053 = vmatprep.subr.mxu0 %v1022
  %1054 = vmatpush1.msra.mxu0 %v1021
  %1055 = vmatprep.subr.mxu0 %v1024
  %1056 = vmatpush1.msra.mxu0 %v1023
  %1057 = vmatprep.subr.mxu0 %v1026
  %1058 = vmatpush1.msra.mxu0 %v1025
  %1059 = vmatprep.subr.mxu0 %v1028
  %1060 = vmatpush1.msra.mxu0 %v1027
  %1061 = vmatprep.subr.mxu0 %v1030
  %1062 = vmatpush1.msra.mxu0 %v1029
  %1063 = vmatprep.subr.mxu0 %v1032
  %1064 = vmatpush1.msra.mxu0 %v1031
  %1065 = vmatprep.subr.mxu0 %v1034
  %1066 = vmatpush1.msra.mxu0 %v1033
  %1067 = vmatprep.subr.mxu0 %v1036
  %1068 = vmatpush1.msra.mxu0 %v1035
  %1069 = vmatprep.subr.mxu0 %v1038
  %1070 = vmatpush1.msra.mxu0 %v1037
  %1071 = vmatprep.subr.mxu0 %v1040
  %1072 = vmatpush1.msra.mxu0 %v1039
  %1073 = vmatprep.subr.mxu0 %v1042
  %1074 = vmatpush1.msra.mxu0 %v1041
  %1075 = vmatprep.subr.mxu0 %v1044
  %1076 = vmatpush1.msra.mxu0 %v1043
  %1077 = vmatprep.subr.mxu0 %v1046
  %1078 = vmatpush1.msra.mxu0 %v1045
  %1079 = vmatprep.subr.mxu0 %v1048
  %1080 = vmatpush1.msra.mxu0 %v1047
  %1081 = vmatprep.subr.mxu0 %v1050
  %1082 = vmatpush1.msra.mxu0 %v1049
  %1083 = vmatprep.subr.mxu0 %v1052
  %1084 = vmatpush1.msra.mxu0 %v1051
  %1085 = vmatprep.subr.mxu0 0.0
  %1086 = vmatpush1.msra.mxu0 0.0
  %1087 = vmatprep.subr.mxu0 0.0
  %1088 = vmatpush1.msra.mxu0 0.0
  %1089 = vmatprep.subr.mxu0 0.0
  %1090 = vmatpush1.msra.mxu0 0.0
  %1091 = vmatprep.subr.mxu0 0.0
  %1092 = vmatpush1.msra.mxu0 0.0
  %1093 = vmatprep.subr.mxu0 0.0
  %1094 = vmatpush1.msra.mxu0 0.0
  %1095 = vmatprep.subr.mxu0 0.0
  %1096 = vmatpush1.msra.mxu0 0.0
  %1097 = vmatprep.subr.mxu0 0.0
  %1098 = vmatpush1.msra.mxu0 0.0
  %1099 = vmatprep.subr.mxu0 0.0
  %1100 = vmatpush1.msra.mxu0 0.0
  %1101 = vmatprep.subr.mxu0 0.0
  %1102 = vmatpush1.msra.mxu0 0.0
  %1103 = vmatprep.subr.mxu0 0.0
  %1104 = vmatpush1.msra.mxu0 0.0
  %1105 = vmatprep.subr.mxu0 0.0
  %1106 = vmatpush1.msra.mxu0 0.0
  %1107 = vmatprep.subr.mxu0 0.0
  %1108 = vmatpush1.msra.mxu0 0.0
  %1109 = vmatprep.subr.mxu0 0.0
  %1110 = vmatpush1.msra.mxu0 0.0
  %1111 = vmatprep.subr.mxu0 0.0
  %1112 = vmatpush1.msra.mxu0 0.0
  %1113 = vmatprep.subr.mxu0 0.0
  %1114 = vmatpush1.msra.mxu0 0.0
  %1115 = vmatprep.subr.mxu0 0.0
  %1116 = vmatpush1.msra.mxu0 0.0
  %1117 = vmatprep.mubr.f32.mxu0 0.0
  %1118 = vmatmul.mubr.f32.gmra.mrb[0].mxu0 %v146
  %v1119 = vpop.f32.mrb[0].mxu0
  %v1120 = vadd.f32 0.0, %v1119
  %v1121 = vpop.f32.mrb[0].mxu0
  %v1122 = vadd.f32 0.0, %v1121
  %1123 = vmatprep.mubr.f32.mxu0 0.0
  %1124 = vmatmul.mubr.f32.gmra.mrb[0].mxu0 %v147
  %v1125 = vpop.f32.mrb[0].mxu0
  %v1126 = vadd.f32 0.0, %v1125
  %v1127 = vpop.f32.mrb[0].mxu0
  %v1128 = vadd.f32 0.0, %v1127
  %1129 = vdwg.mxu0
  %v1130 = vlaneseq
  %v1131 = vshrl.u32 %v1130, 7
  %v1132 = vsub.s32 6, %v1131
  %v1133 = vrot.slane %v23, %v1132
  %v1134 = vlaneseq
  %v1135 = vshrl.u32 %v1134, 7
  %v1136 = vsub.s32 6, %v1135
  %v1137 = vrot.slane %v24, %v1136
  %vm1138 = vcmp.eq.s32.totalorder %v26, %v1133
  %vm1139 = vcmp.eq.s32.totalorder %v26, %v1137
  %vm1140 = vcmp.eq.s32.totalorder %v27, %v1133
  %vm1141 = vcmp.eq.s32.totalorder %v27, %v1137
  %vm1142 = vcmp.eq.s32.totalorder %v28, %v1133
  %vm1143 = vcmp.eq.s32.totalorder %v28, %v1137
  %vm1144 = vcmp.eq.s32.totalorder %v29, %v1133
  %vm1145 = vcmp.eq.s32.totalorder %v29, %v1137
  %vm1146 = vcmp.eq.s32.totalorder %v30, %v1133
  %vm1147 = vcmp.eq.s32.totalorder %v30, %v1137
  %vm1148 = vcmp.eq.s32.totalorder %v31, %v1133
  %vm1149 = vcmp.eq.s32.totalorder %v31, %v1137
  %vm1150 = vcmp.eq.s32.totalorder %v32, %v1133
  %vm1151 = vcmp.eq.s32.totalorder %v32, %v1137
  %vm1152 = vcmp.eq.s32.totalorder %v33, %v1133
  %vm1153 = vcmp.eq.s32.totalorder %v33, %v1137
  %vm1154 = vcmp.eq.s32.totalorder %v34, %v1133
  %vm1155 = vcmp.eq.s32.totalorder %v34, %v1137
  %vm1156 = vcmp.eq.s32.totalorder %v35, %v1133
  %vm1157 = vcmp.eq.s32.totalorder %v35, %v1137
  %vm1158 = vcmp.eq.s32.totalorder %v36, %v1133
  %vm1159 = vcmp.eq.s32.totalorder %v36, %v1137
  %vm1160 = vcmp.eq.s32.totalorder %v37, %v1133
  %vm1161 = vcmp.eq.s32.totalorder %v37, %v1137
  %vm1162 = vcmp.eq.s32.totalorder %v38, %v1133
  %vm1163 = vcmp.eq.s32.totalorder %v38, %v1137
  %vm1164 = vcmp.eq.s32.totalorder %v39, %v1133
  %vm1165 = vcmp.eq.s32.totalorder %v39, %v1137
  %vm1166 = vcmp.eq.s32.totalorder %v40, %v1133
  %vm1167 = vcmp.eq.s32.totalorder %v40, %v1137
  %vm1168 = vcmp.eq.s32.totalorder %v41, %v1133
  %vm1169 = vcmp.eq.s32.totalorder %v41, %v1137
  %v1170 = vsel %vm1138, 1, 0
  %v1171 = vsel %vm1139, 1, 0
  %v1172 = vsel %vm1140, 1, 0
  %v1173 = vsel %vm1141, 1, 0
  %v1174 = vsel %vm1142, 1, 0
  %v1175 = vsel %vm1143, 1, 0
  %v1176 = vsel %vm1144, 1, 0
  %v1177 = vsel %vm1145, 1, 0
  %v1178 = vsel %vm1146, 1, 0
  %v1179 = vsel %vm1147, 1, 0
  %v1180 = vsel %vm1148, 1, 0
  %v1181 = vsel %vm1149, 1, 0
  %v1182 = vsel %vm1150, 1, 0
  %v1183 = vsel %vm1151, 1, 0
  %v1184 = vsel %vm1152, 1, 0
  %v1185 = vsel %vm1153, 1, 0
  %v1186 = vsel %vm1154, 1, 0
  %v1187 = vsel %vm1155, 1, 0
  %v1188 = vsel %vm1156, 1, 0
  %v1189 = vsel %vm1157, 1, 0
  %v1190 = vsel %vm1158, 1, 0
  %v1191 = vsel %vm1159, 1, 0
  %v1192 = vsel %vm1160, 1, 0
  %v1193 = vsel %vm1161, 1, 0
  %v1194 = vsel %vm1162, 1, 0
  %v1195 = vsel %vm1163, 1, 0
  %v1196 = vsel %vm1164, 1, 0
  %v1197 = vsel %vm1165, 1, 0
  %v1198 = vsel %vm1166, 1, 0
  %v1199 = vsel %vm1167, 1, 0
  %v1200 = vsel %vm1168, 1, 0
  %v1201 = vsel %vm1169, 1, 0
  %v1202 = vcvt.s32.f32 %v1170
  %v1203 = vcvt.s32.f32 %v1171
  %v1204 = vcvt.s32.f32 %v1172
  %v1205 = vcvt.s32.f32 %v1173
  %v1206 = vcvt.s32.f32 %v1174
  %v1207 = vcvt.s32.f32 %v1175
  %v1208 = vcvt.s32.f32 %v1176
  %v1209 = vcvt.s32.f32 %v1177
  %v1210 = vcvt.s32.f32 %v1178
  %v1211 = vcvt.s32.f32 %v1179
  %v1212 = vcvt.s32.f32 %v1180
  %v1213 = vcvt.s32.f32 %v1181
  %v1214 = vcvt.s32.f32 %v1182
  %v1215 = vcvt.s32.f32 %v1183
  %v1216 = vcvt.s32.f32 %v1184
  %v1217 = vcvt.s32.f32 %v1185
  %v1218 = vcvt.s32.f32 %v1186
  %v1219 = vcvt.s32.f32 %v1187
  %v1220 = vcvt.s32.f32 %v1188
  %v1221 = vcvt.s32.f32 %v1189
  %v1222 = vcvt.s32.f32 %v1190
  %v1223 = vcvt.s32.f32 %v1191
  %v1224 = vcvt.s32.f32 %v1192
  %v1225 = vcvt.s32.f32 %v1193
  %v1226 = vcvt.s32.f32 %v1194
  %v1227 = vcvt.s32.f32 %v1195
  %v1228 = vcvt.s32.f32 %v1196
  %v1229 = vcvt.s32.f32 %v1197
  %v1230 = vcvt.s32.f32 %v1198
  %v1231 = vcvt.s32.f32 %v1199
  %v1232 = vcvt.s32.f32 %v1200
  %v1233 = vcvt.s32.f32 %v1201
  %1234 = vmatprep.subr.mxu0 %v1203
  %1235 = vmatpush1.msra.mxu0 %v1202
  %1236 = vmatprep.subr.mxu0 %v1205
  %1237 = vmatpush1.msra.mxu0 %v1204
  %1238 = vmatprep.subr.mxu0 %v1207
  %1239 = vmatpush1.msra.mxu0 %v1206
  %1240 = vmatprep.subr.mxu0 %v1209
  %1241 = vmatpush1.msra.mxu0 %v1208
  %1242 = vmatprep.subr.mxu0 %v1211
  %1243 = vmatpush1.msra.mxu0 %v1210
  %1244 = vmatprep.subr.mxu0 %v1213
  %1245 = vmatpush1.msra.mxu0 %v1212
  %1246 = vmatprep.subr.mxu0 %v1215
  %1247 = vmatpush1.msra.mxu0 %v1214
  %1248 = vmatprep.subr.mxu0 %v1217
  %1249 = vmatpush1.msra.mxu0 %v1216
  %1250 = vmatprep.subr.mxu0 %v1219
  %1251 = vmatpush1.msra.mxu0 %v1218
  %1252 = vmatprep.subr.mxu0 %v1221
  %1253 = vmatpush1.msra.mxu0 %v1220
  %1254 = vmatprep.subr.mxu0 %v1223
  %1255 = vmatpush1.msra.mxu0 %v1222
  %1256 = vmatprep.subr.mxu0 %v1225
  %1257 = vmatpush1.msra.mxu0 %v1224
  %1258 = vmatprep.subr.mxu0 %v1227
  %1259 = vmatpush1.msra.mxu0 %v1226
  %1260 = vmatprep.subr.mxu0 %v1229
  %1261 = vmatpush1.msra.mxu0 %v1228
  %1262 = vmatprep.subr.mxu0 %v1231
  %1263 = vmatpush1.msra.mxu0 %v1230
  %1264 = vmatprep.subr.mxu0 %v1233
  %1265 = vmatpush1.msra.mxu0 %v1232
  %1266 = vmatprep.subr.mxu0 0.0
  %1267 = vmatpush1.msra.mxu0 0.0
  %1268 = vmatprep.subr.mxu0 0.0
  %1269 = vmatpush1.msra.mxu0 0.0
  %1270 = vmatprep.subr.mxu0 0.0
  %1271 = vmatpush1.msra.mxu0 0.0
  %1272 = vmatprep.subr.mxu0 0.0
  %1273 = vmatpush1.msra.mxu0 0.0
  %1274 = vmatprep.subr.mxu0 0.0
  %1275 = vmatpush1.msra.mxu0 0.0
  %1276 = vmatprep.subr.mxu0 0.0
  %1277 = vmatpush1.msra.mxu0 0.0
  %1278 = vmatprep.subr.mxu0 0.0
  %1279 = vmatpush1.msra.mxu0 0.0
  %1280 = vmatprep.subr.mxu0 0.0
  %1281 = vmatpush1.msra.mxu0 0.0
  %1282 = vmatprep.subr.mxu0 0.0
  %1283 = vmatpush1.msra.mxu0 0.0
  %1284 = vmatprep.subr.mxu0 0.0
  %1285 = vmatpush1.msra.mxu0 0.0
  %1286 = vmatprep.subr.mxu0 0.0
  %1287 = vmatpush1.msra.mxu0 0.0
  %1288 = vmatprep.subr.mxu0 0.0
  %1289 = vmatpush1.msra.mxu0 0.0
  %1290 = vmatprep.subr.mxu0 0.0
  %1291 = vmatpush1.msra.mxu0 0.0
  %1292 = vmatprep.subr.mxu0 0.0
  %1293 = vmatpush1.msra.mxu0 0.0
  %1294 = vmatprep.subr.mxu0 0.0
  %1295 = vmatpush1.msra.mxu0 0.0
  %1296 = vmatprep.subr.mxu0 0.0
  %1297 = vmatpush1.msra.mxu0 0.0
  %1298 = vmatprep.mubr.f32.mxu0 0.0
  %1299 = vmatmul.mubr.f32.gmra.mrb[0].mxu0 %v146
  %v1300 = vpop.f32.mrb[0].mxu0
  %v1301 = vadd.f32 0.0, %v1300
  %v1302 = vpop.f32.mrb[0].mxu0
  %v1303 = vadd.f32 0.0, %v1302
  %1304 = vmatprep.mubr.f32.mxu0 0.0
  %1305 = vmatmul.mubr.f32.gmra.mrb[0].mxu0 %v147
  %v1306 = vpop.f32.mrb[0].mxu0
  %v1307 = vadd.f32 0.0, %v1306
  %v1308 = vpop.f32.mrb[0].mxu0
  %v1309 = vadd.f32 0.0, %v1308
  %1310 = vdwg.mxu0
  %v1311 = vlaneseq
  %v1312 = vshrl.u32 %v1311, 7
  %v1313 = vsub.s32 7, %v1312
  %v1314 = vrot.slane %v23, %v1313
  %v1315 = vlaneseq
  %v1316 = vshrl.u32 %v1315, 7
  %v1317 = vsub.s32 7, %v1316
  %v1318 = vrot.slane %v24, %v1317
  %vm1319 = vcmp.eq.s32.totalorder %v26, %v1314
  %vm1320 = vcmp.eq.s32.totalorder %v26, %v1318
  %vm1321 = vcmp.eq.s32.totalorder %v27, %v1314
  %vm1322 = vcmp.eq.s32.totalorder %v27, %v1318
  %vm1323 = vcmp.eq.s32.totalorder %v28, %v1314
  %vm1324 = vcmp.eq.s32.totalorder %v28, %v1318
  %vm1325 = vcmp.eq.s32.totalorder %v29, %v1314
  %vm1326 = vcmp.eq.s32.totalorder %v29, %v1318
  %vm1327 = vcmp.eq.s32.totalorder %v30, %v1314
  %vm1328 = vcmp.eq.s32.totalorder %v30, %v1318
  %vm1329 = vcmp.eq.s32.totalorder %v31, %v1314
  %vm1330 = vcmp.eq.s32.totalorder %v31, %v1318
  %vm1331 = vcmp.eq.s32.totalorder %v32, %v1314
  %vm1332 = vcmp.eq.s32.totalorder %v32, %v1318
  %vm1333 = vcmp.eq.s32.totalorder %v33, %v1314
  %vm1334 = vcmp.eq.s32.totalorder %v33, %v1318
  %vm1335 = vcmp.eq.s32.totalorder %v34, %v1314
  %vm1336 = vcmp.eq.s32.totalorder %v34, %v1318
  %vm1337 = vcmp.eq.s32.totalorder %v35, %v1314
  %vm1338 = vcmp.eq.s32.totalorder %v35, %v1318
  %vm1339 = vcmp.eq.s32.totalorder %v36, %v1314
  %vm1340 = vcmp.eq.s32.totalorder %v36, %v1318
  %vm1341 = vcmp.eq.s32.totalorder %v37, %v1314
  %vm1342 = vcmp.eq.s32.totalorder %v37, %v1318
  %vm1343 = vcmp.eq.s32.totalorder %v38, %v1314
  %vm1344 = vcmp.eq.s32.totalorder %v38, %v1318
  %vm1345 = vcmp.eq.s32.totalorder %v39, %v1314
  %vm1346 = vcmp.eq.s32.totalorder %v39, %v1318
  %vm1347 = vcmp.eq.s32.totalorder %v40, %v1314
  %vm1348 = vcmp.eq.s32.totalorder %v40, %v1318
  %vm1349 = vcmp.eq.s32.totalorder %v41, %v1314
  %vm1350 = vcmp.eq.s32.totalorder %v41, %v1318
  %v1351 = vsel %vm1319, 1, 0
  %v1352 = vsel %vm1320, 1, 0
  %v1353 = vsel %vm1321, 1, 0
  %v1354 = vsel %vm1322, 1, 0
  %v1355 = vsel %vm1323, 1, 0
  %v1356 = vsel %vm1324, 1, 0
  %v1357 = vsel %vm1325, 1, 0
  %v1358 = vsel %vm1326, 1, 0
  %v1359 = vsel %vm1327, 1, 0
  %v1360 = vsel %vm1328, 1, 0
  %v1361 = vsel %vm1329, 1, 0
  %v1362 = vsel %vm1330, 1, 0
  %v1363 = vsel %vm1331, 1, 0
  %v1364 = vsel %vm1332, 1, 0
  %v1365 = vsel %vm1333, 1, 0
  %v1366 = vsel %vm1334, 1, 0
  %v1367 = vsel %vm1335, 1, 0
  %v1368 = vsel %vm1336, 1, 0
  %v1369 = vsel %vm1337, 1, 0
  %v1370 = vsel %vm1338, 1, 0
  %v1371 = vsel %vm1339, 1, 0
  %v1372 = vsel %vm1340, 1, 0
  %v1373 = vsel %vm1341, 1, 0
  %v1374 = vsel %vm1342, 1, 0
  %v1375 = vsel %vm1343, 1, 0
  %v1376 = vsel %vm1344, 1, 0
  %v1377 = vsel %vm1345, 1, 0
  %v1378 = vsel %vm1346, 1, 0
  %v1379 = vsel %vm1347, 1, 0
  %v1380 = vsel %vm1348, 1, 0
  %v1381 = vsel %vm1349, 1, 0
  %v1382 = vsel %vm1350, 1, 0
  %v1383 = vcvt.s32.f32 %v1351
  %v1384 = vcvt.s32.f32 %v1352
  %v1385 = vcvt.s32.f32 %v1353
  %v1386 = vcvt.s32.f32 %v1354
  %v1387 = vcvt.s32.f32 %v1355
  %v1388 = vcvt.s32.f32 %v1356
  %v1389 = vcvt.s32.f32 %v1357
  %v1390 = vcvt.s32.f32 %v1358
  %v1391 = vcvt.s32.f32 %v1359
  %v1392 = vcvt.s32.f32 %v1360
  %v1393 = vcvt.s32.f32 %v1361
  %v1394 = vcvt.s32.f32 %v1362
  %v1395 = vcvt.s32.f32 %v1363
  %v1396 = vcvt.s32.f32 %v1364
  %v1397 = vcvt.s32.f32 %v1365
  %v1398 = vcvt.s32.f32 %v1366
  %v1399 = vcvt.s32.f32 %v1367
  %v1400 = vcvt.s32.f32 %v1368
  %v1401 = vcvt.s32.f32 %v1369
  %v1402 = vcvt.s32.f32 %v1370
  %v1403 = vcvt.s32.f32 %v1371
  %v1404 = vcvt.s32.f32 %v1372
  %v1405 = vcvt.s32.f32 %v1373
  %v1406 = vcvt.s32.f32 %v1374
  %v1407 = vcvt.s32.f32 %v1375
  %v1408 = vcvt.s32.f32 %v1376
  %v1409 = vcvt.s32.f32 %v1377
  %v1410 = vcvt.s32.f32 %v1378
  %v1411 = vcvt.s32.f32 %v1379
  %v1412 = vcvt.s32.f32 %v1380
  %v1413 = vcvt.s32.f32 %v1381
  %v1414 = vcvt.s32.f32 %v1382
  %1415 = vmatprep.subr.mxu0 %v1384
  %1416 = vmatpush1.msra.mxu0 %v1383
  %1417 = vmatprep.subr.mxu0 %v1386
  %1418 = vmatpush1.msra.mxu0 %v1385
  %1419 = vmatprep.subr.mxu0 %v1388
  %1420 = vmatpush1.msra.mxu0 %v1387
  %1421 = vmatprep.subr.mxu0 %v1390
  %1422 = vmatpush1.msra.mxu0 %v1389
  %1423 = vmatprep.subr.mxu0 %v1392
  %1424 = vmatpush1.msra.mxu0 %v1391
  %1425 = vmatprep.subr.mxu0 %v1394
  %1426 = vmatpush1.msra.mxu0 %v1393
  %1427 = vmatprep.subr.mxu0 %v1396
  %1428 = vmatpush1.msra.mxu0 %v1395
  %1429 = vmatprep.subr.mxu0 %v1398
  %1430 = vmatpush1.msra.mxu0 %v1397
  %1431 = vmatprep.subr.mxu0 %v1400
  %1432 = vmatpush1.msra.mxu0 %v1399
  %1433 = vmatprep.subr.mxu0 %v1402
  %1434 = vmatpush1.msra.mxu0 %v1401
  %1435 = vmatprep.subr.mxu0 %v1404
  %1436 = vmatpush1.msra.mxu0 %v1403
  %1437 = vmatprep.subr.mxu0 %v1406
  %1438 = vmatpush1.msra.mxu0 %v1405
  %1439 = vmatprep.subr.mxu0 %v1408
  %1440 = vmatpush1.msra.mxu0 %v1407
  %1441 = vmatprep.subr.mxu0 %v1410
  %1442 = vmatpush1.msra.mxu0 %v1409
  %1443 = vmatprep.subr.mxu0 %v1412
  %1444 = vmatpush1.msra.mxu0 %v1411
  %1445 = vmatprep.subr.mxu0 %v1414
  %1446 = vmatpush1.msra.mxu0 %v1413
  %1447 = vmatprep.subr.mxu0 0.0
  %1448 = vmatpush1.msra.mxu0 0.0
  %1449 = vmatprep.subr.mxu0 0.0
  %1450 = vmatpush1.msra.mxu0 0.0
  %1451 = vmatprep.subr.mxu0 0.0
  %1452 = vmatpush1.msra.mxu0 0.0
  %1453 = vmatprep.subr.mxu0 0.0
  %1454 = vmatpush1.msra.mxu0 0.0
  %1455 = vmatprep.subr.mxu0 0.0
  %1456 = vmatpush1.msra.mxu0 0.0
  %1457 = vmatprep.subr.mxu0 0.0
  %1458 = vmatpush1.msra.mxu0 0.0
  %1459 = vmatprep.subr.mxu0 0.0
  %1460 = vmatpush1.msra.mxu0 0.0
  %1461 = vmatprep.subr.mxu0 0.0
  %1462 = vmatpush1.msra.mxu0 0.0
  %1463 = vmatprep.subr.mxu0 0.0
  %1464 = vmatpush1.msra.mxu0 0.0
  %1465 = vmatprep.subr.mxu0 0.0
  %1466 = vmatpush1.msra.mxu0 0.0
  %1467 = vmatprep.subr.mxu0 0.0
  %1468 = vmatpush1.msra.mxu0 0.0
  %1469 = vmatprep.subr.mxu0 0.0
  %1470 = vmatpush1.msra.mxu0 0.0
  %1471 = vmatprep.subr.mxu0 0.0
  %1472 = vmatpush1.msra.mxu0 0.0
  %1473 = vmatprep.subr.mxu0 0.0
  %1474 = vmatpush1.msra.mxu0 0.0
  %1475 = vmatprep.subr.mxu0 0.0
  %1476 = vmatpush1.msra.mxu0 0.0
  %1477 = vmatprep.subr.mxu0 0.0
  %1478 = vmatpush1.msra.mxu0 0.0
  %1479 = vmatprep.mubr.f32.mxu0 0.0
  %1480 = vmatmul.mubr.f32.gmra.mrb[0].mxu0 %v146
  %v1481 = vpop.f32.mrb[0].mxu0
  %v1482 = vadd.f32 0.0, %v1481
  %v1483 = vpop.f32.mrb[0].mxu0
  %v1484 = vadd.f32 0.0, %v1483
  %1485 = vmatprep.mubr.f32.mxu0 0.0
  %1486 = vmatmul.mubr.f32.gmra.mrb[0].mxu0 %v147
  %v1487 = vpop.f32.mrb[0].mxu0
  %v1488 = vadd.f32 0.0, %v1487
  %v1489 = vpop.f32.mrb[0].mxu0
  %v1490 = vadd.f32 0.0, %v1489
  %1491 = vdwg.mxu0
  %v1492 = vld [vmem:[%s2] sm:$0xff]
  %v1493 = vld [vmem:[%s2 + $0x8] sm:$0xff]
  %v1494 = vld [vmem:[%s2 + $0x10] sm:$0xff]
  %v1495 = vld [vmem:[%s2 + $0x18] sm:$0xff]
  %v1496 = vld [vmem:[%s3] sm:$0xff]
  %v1497 = vld [vmem:[%s3 + $0x8] sm:$0xff]
  %v1498 = vld [vmem:[%s3 + $0x10] sm:$0xff]
  %v1499 = vld [vmem:[%s3 + $0x18] sm:$0xff]
  %1501 = vset.pattern.permute.xlu0 0
  %1502 = vperm.xlu0 %1501, %v1496
  %v1503 = vpop.permute.xlu0 %1502
  %1506 = vset.pattern.permute.xlu0 0
  %1507 = vperm.xlu0 %1506, %v1497
  %v1508 = vpop.permute.xlu0 %1507
  %1511 = vset.pattern.permute.xlu0 0
  %1512 = vperm.xlu0 %1511, %v1498
  %v1513 = vpop.permute.xlu0 %1512
  %1516 = vset.pattern.permute.xlu0 0
  %1517 = vperm.xlu0 %1516, %v1499
  %v1518 = vpop.permute.xlu0 %1517
  %1520 = vmatprep.subr.mxu0 %v217
  %1521 = vmatpush1.msra.mxu0 %v215
  %1522 = vmatprep.subr.mxu0 %v223
  %1523 = vmatpush1.msra.mxu0 %v221
  %1524 = vmatprep.subr.mxu0 %v398
  %1525 = vmatpush1.msra.mxu0 %v396
  %1526 = vmatprep.subr.mxu0 %v404
  %1527 = vmatpush1.msra.mxu0 %v402
  %1528 = vmatprep.subr.mxu0 %v579
  %1529 = vmatpush1.msra.mxu0 %v577
  %1530 = vmatprep.subr.mxu0 %v585
  %1531 = vmatpush1.msra.mxu0 %v583
  %1532 = vmatprep.subr.mxu0 %v760
  %1533 = vmatpush1.msra.mxu0 %v758
  %1534 = vmatprep.subr.mxu0 %v766
  %1535 = vmatpush1.msra.mxu0 %v764
  %1536 = vmatprep.subr.mxu0 %v941
  %1537 = vmatpush1.msra.mxu0 %v939
  %1538 = vmatprep.subr.mxu0 %v947
  %1539 = vmatpush1.msra.mxu0 %v945
  %1540 = vmatprep.subr.mxu0 %v1122
  %1541 = vmatpush1.msra.mxu0 %v1120
  %1542 = vmatprep.subr.mxu0 %v1128
  %1543 = vmatpush1.msra.mxu0 %v1126
  %1544 = vmatprep.subr.mxu0 %v1303
  %1545 = vmatpush1.msra.mxu0 %v1301
  %1546 = vmatprep.subr.mxu0 %v1309
  %1547 = vmatpush1.msra.mxu0 %v1307
  %1548 = vmatprep.subr.mxu0 %v1484
  %1549 = vmatpush1.msra.mxu0 %v1482
  %1550 = vmatprep.subr.mxu0 %v1490
  %1551 = vmatpush1.msra.mxu0 %v1488
  %1552 = vmatprep.subr.mxu0 0.0
  %1553 = vmatpush1.msra.mxu0 0.0
  %1554 = vmatprep.subr.mxu0 0.0
  %1555 = vmatpush1.msra.mxu0 0.0
  %1556 = vmatprep.subr.mxu0 0.0
  %1557 = vmatpush1.msra.mxu0 0.0
  %1558 = vmatprep.subr.mxu0 0.0
  %1559 = vmatpush1.msra.mxu0 0.0
  %1560 = vmatprep.subr.mxu0 0.0
  %1561 = vmatpush1.msra.mxu0 0.0
  %1562 = vmatprep.subr.mxu0 0.0
  %1563 = vmatpush1.msra.mxu0 0.0
  %1564 = vmatprep.subr.mxu0 0.0
  %1565 = vmatpush1.msra.mxu0 0.0
  %1566 = vmatprep.subr.mxu0 0.0
  %1567 = vmatpush1.msra.mxu0 0.0
  %1568 = vmatprep.subr.mxu0 0.0
  %1569 = vmatpush1.msra.mxu0 0.0
  %1570 = vmatprep.subr.mxu0 0.0
  %1571 = vmatpush1.msra.mxu0 0.0
  %1572 = vmatprep.subr.mxu0 0.0
  %1573 = vmatpush1.msra.mxu0 0.0
  %1574 = vmatprep.subr.mxu0 0.0
  %1575 = vmatpush1.msra.mxu0 0.0
  %1576 = vmatprep.subr.mxu0 0.0
  %1577 = vmatpush1.msra.mxu0 0.0
  %1578 = vmatprep.subr.mxu0 0.0
  %1579 = vmatpush1.msra.mxu0 0.0
  %1580 = vmatprep.subr.mxu0 0.0
  %1581 = vmatpush1.msra.mxu0 0.0
  %1582 = vmatprep.subr.mxu0 0.0
  %1583 = vmatpush1.msra.mxu0 0.0
  %1584 = vmatprep.mubr.f32.mxu0 0.0
  %1585 = vmatmul.mubr.f32.gmra.mrb[0].mxu0 %v1492
  %v1586 = vpop.f32.mrb[0].mxu0
  %v1587 = vadd.f32 %v1503, %v1586
  %v1588 = vpop.f32.mrb[0].mxu0
  %v1589 = vadd.f32 %v1503, %v1588
  %1590 = vmatprep.mubr.f32.mxu0 0.0
  %1591 = vmatmul.mubr.f32.gmra.mrb[0].mxu0 %v1493
  %v1592 = vpop.f32.mrb[0].mxu0
  %v1593 = vadd.f32 %v1508, %v1592
  %v1594 = vpop.f32.mrb[0].mxu0
  %v1595 = vadd.f32 %v1508, %v1594
  %1596 = vmatprep.mubr.f32.mxu0 0.0
  %1597 = vmatmul.mubr.f32.gmra.mrb[0].mxu0 %v1494
  %v1598 = vpop.f32.mrb[0].mxu0
  %v1599 = vadd.f32 %v1513, %v1598
  %v1600 = vpop.f32.mrb[0].mxu0
  %v1601 = vadd.f32 %v1513, %v1600
  %1602 = vmatprep.mubr.f32.mxu0 0.0
  %1603 = vmatmul.mubr.f32.gmra.mrb[0].mxu0 %v1495
  %v1604 = vpop.f32.mrb[0].mxu0
  %v1605 = vadd.f32 %v1518, %v1604
  %v1606 = vpop.f32.mrb[0].mxu0
  %v1607 = vadd.f32 %v1518, %v1606
  %1608 = vdwg.mxu0
  %v1609 = vmax.f32 %v1587, -1.0
  %v1610 = vmax.f32 %v1589, -1.0
  %v1611 = vmax.f32 %v1593, -1.0
  %v1612 = vmax.f32 %v1595, -1.0
  %v1613 = vmax.f32 %v1599, -1.0
  %v1614 = vmax.f32 %v1601, -1.0
  %v1615 = vmax.f32 %v1605, -1.0
  %v1616 = vmax.f32 %v1607, -1.0
  %v1617 = vmin.f32 %v1609, 1.0
  %v1618 = vmin.f32 %v1610, 1.0
  %v1619 = vmin.f32 %v1611, 1.0
  %v1620 = vmin.f32 %v1612, 1.0
  %v1621 = vmin.f32 %v1613, 1.0
  %v1622 = vmin.f32 %v1614, 1.0
  %v1623 = vmin.f32 %v1615, 1.0
  %v1624 = vmin.f32 %v1616, 1.0
  %v1625 = vld [vmem:[%s4] sm:$0xff]
  %v1626 = vld [vmem:[%s5] sm:$0xff]
  %1628 = vset.pattern.permute.xlu0 0
  %1629 = vperm.xlu0 %1628, %v1626
  %v1630 = vpop.permute.xlu0 %1629
  %vm1632 = vcmask 261120
  %v1634 = vsel %vm1632, %v1625, 0
  %1636 = vmatprep.subr.mxu0 %v1618
  %1637 = vmatpush1.msra.mxu0 %v1617
  %1638 = vmatprep.subr.mxu0 %v1620
  %1639 = vmatpush1.msra.mxu0 %v1619
  %1640 = vmatprep.subr.mxu0 %v1622
  %1641 = vmatpush1.msra.mxu0 %v1621
  %1642 = vmatprep.subr.mxu0 %v1624
  %1643 = vmatpush1.msra.mxu0 %v1623
  %1644 = vmatprep.subr.mxu0 0.0
  %1645 = vmatpush1.msra.mxu0 0.0
  %1646 = vmatprep.subr.mxu0 0.0
  %1647 = vmatpush1.msra.mxu0 0.0
  %1648 = vmatprep.subr.mxu0 0.0
  %1649 = vmatpush1.msra.mxu0 0.0
  %1650 = vmatprep.subr.mxu0 0.0
  %1651 = vmatpush1.msra.mxu0 0.0
  %1652 = vmatprep.subr.mxu0 0.0
  %1653 = vmatpush1.msra.mxu0 0.0
  %1654 = vmatprep.subr.mxu0 0.0
  %1655 = vmatpush1.msra.mxu0 0.0
  %1656 = vmatprep.subr.mxu0 0.0
  %1657 = vmatpush1.msra.mxu0 0.0
  %1658 = vmatprep.subr.mxu0 0.0
  %1659 = vmatpush1.msra.mxu0 0.0
  %1660 = vmatprep.subr.mxu0 0.0
  %1661 = vmatpush1.msra.mxu0 0.0
  %1662 = vmatprep.subr.mxu0 0.0
  %1663 = vmatpush1.msra.mxu0 0.0
  %1664 = vmatprep.subr.mxu0 0.0
  %1665 = vmatpush1.msra.mxu0 0.0
  %1666 = vmatprep.subr.mxu0 0.0
  %1667 = vmatpush1.msra.mxu0 0.0
  %1668 = vmatprep.subr.mxu0 0.0
  %1669 = vmatpush1.msra.mxu0 0.0
  %1670 = vmatprep.subr.mxu0 0.0
  %1671 = vmatpush1.msra.mxu0 0.0
  %1672 = vmatprep.subr.mxu0 0.0
  %1673 = vmatpush1.msra.mxu0 0.0
  %1674 = vmatprep.subr.mxu0 0.0
  %1675 = vmatpush1.msra.mxu0 0.0
  %1676 = vmatprep.subr.mxu0 0.0
  %1677 = vmatpush1.msra.mxu0 0.0
  %1678 = vmatprep.subr.mxu0 0.0
  %1679 = vmatpush1.msra.mxu0 0.0
  %1680 = vmatprep.subr.mxu0 0.0
  %1681 = vmatpush1.msra.mxu0 0.0
  %1682 = vmatprep.subr.mxu0 0.0
  %1683 = vmatpush1.msra.mxu0 0.0
  %1684 = vmatprep.subr.mxu0 0.0
  %1685 = vmatpush1.msra.mxu0 0.0
  %1686 = vmatprep.subr.mxu0 0.0
  %1687 = vmatpush1.msra.mxu0 0.0
  %1688 = vmatprep.subr.mxu0 0.0
  %1689 = vmatpush1.msra.mxu0 0.0
  %1690 = vmatprep.subr.mxu0 0.0
  %1691 = vmatpush1.msra.mxu0 0.0
  %1692 = vmatprep.subr.mxu0 0.0
  %1693 = vmatpush1.msra.mxu0 0.0
  %1694 = vmatprep.subr.mxu0 0.0
  %1695 = vmatpush1.msra.mxu0 0.0
  %1696 = vmatprep.subr.mxu0 0.0
  %1697 = vmatpush1.msra.mxu0 0.0
  %1698 = vmatprep.subr.mxu0 0.0
  %1699 = vmatpush1.msra.mxu0 0.0
  %1700 = vmatprep.mubr.f32.mxu0 0.0
  %1701 = vmatmul.mubr.f32.gmra.mrb[0].mxu0 %v1634
  %v1702 = vpop.f32.mrb[0].mxu0
  %v1703 = vadd.f32 %v1630, %v1702
  %v1704 = vpop.f32.mrb[0].mxu0
  %v1705 = vadd.f32 %v1630, %v1704
  %1706 = vdwg.mxu0
  %1707 = vst [vmem:[%s6] sm:$0xff] %v1703
  %1708 = vst [vmem:[%s6 + $0x8] sm:$0xff] %v1705
  // Predicated region
  $region26: #{sswe_forward.1} parent=0 // pred_check
    _
  $region27: #{sswe_forward.1} parent=0 // pred_check_branch
    %1710 = sbr.rel (0) target = $region29
  $region28: #{sswe_forward.1} parent=0 // pred_region
    _
  $region29: #{sswe_forward.1} parent=0 // pred_fallthru
    _
  // Predicated region
  $region30: #{sswe_forward.1} parent=0 // pred_check
    _
  $region31: #{sswe_forward.1} parent=0 // pred_check_branch
    %1712 = sbr.rel (0) target = $region33
  $region32: #{sswe_forward.1} parent=0 // pred_region
    _
  $region33: #{sswe_forward.1} parent=0 // pred_fallthru
    _

</llo_original>
